<compile_context>
chip_gen: v5e
topology: v5e:2x2
jax: 0.10.0
libtpu: 0.0.40
codegen_flags: <defaults>
</compile_context>

<pallas_src>
import functools

import numpy as np

import jax
import jax.numpy as jnp
from jax.experimental import pallas as pl
from jax.experimental.pallas import tpu as pltpu

_C_PAD = 8  # zero-padded input-channel count (3 -> 8); im2col K = 9*_C_PAD = 72


# ---------------------------------------------------------------------------
# In-kernel helpers
# ---------------------------------------------------------------------------
def _fill_im2col(col_ref, a, col_off, w_row, m_out):
    # a: (C_PAD, lp) bf16 planar padded image (row stride w_row = w+2).
    # Output pixel o = y*w_row + x for tap (dy, dx) reads input o + dy*w_row + dx.
    # Rows of col are grouped tap-major: row = tap*C_PAD + c.
    for dy in range(3):
        for dx in range(3):
            k = dy * 3 + dx
            off = dy * w_row + dx                                  # static offsets
            col_ref[k * _C_PAD:(k + 1) * _C_PAD,
                    col_off:col_off + m_out] = a[:, off:off + m_out]


def _forward(col, w1, b1, w2, b2):
    # col: (72, N) bf16; single fused MXU dot (was 9 K=8 dots).
    pre = jnp.dot(w1, col, preferred_element_type=jnp.float32)      # (C_hid, N) f32
    feat = jnp.maximum(pre + b1, 0.0)
    logits = jnp.dot(w2, feat.astype(jnp.bfloat16),
                     preferred_element_type=jnp.float32) + b2       # (n_cls, N) f32
    return feat, logits


def _write_partials(sse_ref, sup_sse, reg_sse):
    # Per-step partial SSEs -> lane-dense (2,128) block; reduced in XLA.
    row = jax.lax.broadcasted_iota(jnp.int32, (2, 128), 0)
    sse_ref[0] = jnp.where(row == 0, sup_sse, reg_sse)


# ---------------------------------------------------------------------------
# Kernels: conv3x3 + relu + conv1x1 (+ masked SSE partials)
# ---------------------------------------------------------------------------
def _consistency_kernel_pair(img1_ref, img2_ref, label_ref, mask_ref,
                             w1_ref, b1_ref, w2_ref, b2_ref,
                             feat_ref, sse_ref, col_ref,
                             *, w_row, m_out, bl):
    i = pl.program_id(0)

    # Build one im2col buffer covering BOTH images (lane concat, N = 2*m_out).
    _fill_im2col(col_ref, img1_ref[0], 0, w_row, m_out)
    _fill_im2col(col_ref, img2_ref[0], m_out, w_row, m_out)

    feat, logits = _forward(col_ref[...], w1_ref[...], b1_ref[...],
                            w2_ref[...], b2_ref[...])

    feat_ref[0] = feat[:, :m_out]                                   # lane-aligned slice

    m = mask_ref[...]                                               # (n_cls, m_out) 0/1
    logits1 = logits[:, :m_out]
    logits2 = logits[:, m_out:]

    d_reg = logits1 - logits2
    reg_sse = jnp.sum(d_reg * d_reg * m)

    d_sup = logits1 - label_ref[0]
    sup_sse = jnp.sum(d_sup * d_sup * m) * (i < bl).astype(jnp.float32)

    _write_partials(sse_ref, sup_sse, reg_sse)


def _consistency_kernel_single(img1_ref, label_ref, mask_ref,
                               w1_ref, b1_ref, w2_ref, b2_ref,
                               feat_ref, sse_ref, col_ref,
                               *, w_row, m_out, bl):
    i = pl.program_id(0)
    _fill_im2col(col_ref, img1_ref[0], 0, w_row, m_out)
    feat, logits = _forward(col_ref[...], w1_ref[...], b1_ref[...],
                            w2_ref[...], b2_ref[...])
    feat_ref[0] = feat
    d_sup = logits - label_ref[0]
    sup_sse = jnp.sum(d_sup * d_sup * mask_ref[...]) * (i < bl).astype(jnp.float32)
    _write_partials(sse_ref, sup_sse, jnp.float32(0.0))


# ---------------------------------------------------------------------------
# pallas_call builder
# ---------------------------------------------------------------------------
def _build_consistency_call(*, b, bl, c_hidden, n_cls, lp, m_out, w_row, with_reg):
    kernel = functools.partial(
        _consistency_kernel_pair if with_reg else _consistency_kernel_single,
        w_row=w_row, m_out=m_out, bl=bl)

    img_spec = pl.BlockSpec((1, _C_PAD, lp), lambda i: (i, 0, 0))
    in_specs = [img_spec]
    if with_reg:
        in_specs.append(pl.BlockSpec((1, _C_PAD, lp), lambda i: (i, 0, 0)))
    in_specs += [
        pl.BlockSpec((1, n_cls, m_out),
                     lambda i: (jnp.minimum(i, bl - 1), 0, 0)),     # label (clamped)
        pl.BlockSpec((n_cls, m_out), lambda i: (0, 0)),             # valid-col mask
        pl.BlockSpec((c_hidden, 9 * _C_PAD), lambda i: (0, 0)),     # conv3x3 W (flat)
        pl.BlockSpec((c_hidden, 1), lambda i: (0, 0)),              # conv3x3 b
        pl.BlockSpec((n_cls, c_hidden), lambda i: (0, 0)),          # conv1x1 W
        pl.BlockSpec((n_cls, 1), lambda i: (0, 0)),                 # conv1x1 b
    ]

    n_imgs = 2 if with_reg else 1
    grid_spec = pltpu.PrefetchScalarGridSpec(
        num_scalar_prefetch=0,
        grid=(b,),
        in_specs=in_specs,
        out_specs=(
            pl.BlockSpec((1, c_hidden, m_out), lambda i: (i, 0, 0)),  # featT (lane-dense)
            pl.BlockSpec((1, 2, 128), lambda i: (i, 0, 0)),           # [sup, reg] partials
        ),
        scratch_shapes=[pltpu.VMEM((9 * _C_PAD, n_imgs * m_out), jnp.bfloat16)],
    )

    return pl.pallas_call(
        kernel,
        out_shape=(
            jax.ShapeDtypeStruct((b, c_hidden, m_out), jnp.float32),
            jax.ShapeDtypeStruct((b, 2, 128), jnp.float32),
        ),
        grid_spec=grid_spec,
        compiler_params=pltpu.CompilerParams(
            # No carried accumulator anymore (per-step partial outputs), so the
            # batch axis is free for megacore sharding on v7x.
            dimension_semantics=("parallel",),
        ),
    )


# ---------------------------------------------------------------------------
# XLA-side layout prep (cheap) + jitted entry points
# ---------------------------------------------------------------------------
def _to_planar(img, lp):
    # (b, c, h, w) f32 -> channel-padded, spatially padded (1px), flattened,
    # lane-tail padded, bf16:  (b, C_PAD, lp)
    b, c_in, h, w = img.shape
    x = jnp.pad(img, ((0, 0), (0, _C_PAD - c_in), (1, 1), (1, 1)))
    x = x.reshape(b, _C_PAD, (h + 2) * (w + 2))
    x = jnp.pad(x, ((0, 0), (0, 0), (0, lp - (h + 2) * (w + 2))))
    return x.astype(jnp.bfloat16)


def _prep_label(label, m_out):
    bl, n_cls, h, w = label.shape
    lab = jnp.pad(label, ((0, 0), (0, 0), (0, 0), (0, 2)))
    lab = lab.reshape(bl, n_cls, h * (w + 2))
    return jnp.pad(lab, ((0, 0), (0, 0), (0, m_out - h * (w + 2))))


def _valid_mask(h, w, m_out, n_cls):
    cols = jnp.arange(m_out, dtype=jnp.int32)
    valid = (cols < h * (w + 2)) & ((cols % (w + 2)) < w)
    return jnp.broadcast_to(valid.astype(jnp.float32)[None, :], (n_cls, m_out))


def _geometry(h, w):
    w_row = w + 2
    m_out = ((h * w_row + 127) // 128) * 128        # lane-dense output width
    lp = m_out + 2 * w_row + 2                      # covers the largest tap offset
    return w_row, m_out, lp


def _postprocess(feat_pad, part, *, b, bl, c_hidden, n_cls, h, w, w_row):
    feat = feat_pad[:, :, :h * w_row].reshape(b, c_hidden, h, w_row)[:, :, :, :w]
    sup = jnp.sum(part[:, 0, 0]) / float(bl * n_cls * h * w)
    reg = jnp.sum(part[:, 1, 0]) / float(b * n_cls * h * w)
    return feat, sup, reg


@jax.jit
def _consistency_apply_pair(img1, img2, label, w1, b1, w2, b2):
    b, _, h, w = img1.shape
    bl, n_cls = label.shape[0], label.shape[1]
    c_hidden = w1.shape[0]
    w_row, m_out, lp = _geometry(h, w)
    call = _build_consistency_call(b=b, bl=bl, c_hidden=c_hidden, n_cls=n_cls,
                                   lp=lp, m_out=m_out, w_row=w_row, with_reg=True)
    feat_pad, part = call(_to_planar(img1, lp), _to_planar(img2, lp),
                          _prep_label(label, m_out), _valid_mask(h, w, m_out, n_cls),
                          w1, b1, w2, b2)
    return _postprocess(feat_pad, part, b=b, bl=bl, c_hidden=c_hidden,
                        n_cls=n_cls, h=h, w=w, w_row=w_row)


@jax.jit
def _consistency_apply_single(img1, label, w1, b1, w2, b2):
    b, _, h, w = img1.shape
    bl, n_cls = label.shape[0], label.shape[1]
    c_hidden = w1.shape[0]
    w_row, m_out, lp = _geometry(h, w)
    call = _build_consistency_call(b=b, bl=bl, c_hidden=c_hidden, n_cls=n_cls,
                                   lp=lp, m_out=m_out, w_row=w_row, with_reg=False)
    feat_pad, part = call(_to_planar(img1, lp),
                          _prep_label(label, m_out), _valid_mask(h, w, m_out, n_cls),
                          w1, b1, w2, b2)
    feat, sup, _ = _postprocess(feat_pad, part, b=b, bl=bl, c_hidden=c_hidden,
                                n_cls=n_cls, h=h, w=w, w_row=w_row)
    return feat, sup


# ---------------------------------------------------------------------------
# Synthetic Consistency model
# ---------------------------------------------------------------------------
class Consistency:
    def __init__(self, key, c_in=3, c_hidden=32, n_cls=3):
        assert c_in <= _C_PAD
        k1, k2 = jax.random.split(key)
        # conv3x3 weight stored pre-flattened as (C_hid, 9*C_PAD), column index
        # = tap*C_PAD + c with tap = dy*3 + dx; padded channels are zero.
        w1 = 0.1 * jax.random.normal(k1, (c_hidden, 9, c_in), jnp.float32)
        w1 = jnp.pad(w1, ((0, 0), (0, 0), (0, _C_PAD - c_in)))
        self.w1 = w1.reshape(c_hidden, 9 * _C_PAD).astype(jnp.bfloat16)
        self.b1 = jnp.zeros((c_hidden, 1), jnp.float32)
        w2 = 0.1 * jax.random.normal(k2, (n_cls, c_hidden), jnp.float32)
        self.w2 = w2.astype(jnp.bfloat16)
        self.b2 = jnp.zeros((n_cls, 1), jnp.float32)
        self.c_hidden, self.n_cls, self.c_in = c_hidden, n_cls, c_in

    def __call__(self, img, label, ulabel=None, aug_weak=None, aug_strong=None,
                 iter=0, epoch=-1):
        if aug_weak is not None:
            feat, sup, reg = _consistency_apply_pair(
                img, aug_weak, label, self.w1, self.b1, self.w2, self.b2)
        else:
            # sup-only kernel variant: no second forward, no second image DMA.
            feat, sup = _consistency_apply_single(
                img, label, self.w1, self.b1, self.w2, self.b2)
            reg = jnp.zeros((), jnp.float32)
        return feat, {"sup-loss": sup, "reg-loss": reg}


# ---------------------------------------------------------------------------
# ConsistencyWrapper (matches the PyTorch forward semantics)
# ---------------------------------------------------------------------------
class ConsistencyWrapper:
    def __init__(self, cfg, cfg_loss, model):
        self.model = model
        self.reg_weight = cfg_loss["reg_weight"]
        self.sup_weight = cfg_loss["sup_weight"]
        self.pretrain_classifier_epoch = cfg["pretrain_classifier_epoch"]
        self.training = True

    def forward(self, img1, label, ulabel=None, img2=None, aug_weak=None,
                aug_strong=None, iter=0, max_iter=-1, epoch=-1):
        feat, results = self.model(img=img1, label=label, ulabel=ulabel,
                                   aug_weak=img2, aug_strong=aug_strong,
                                   iter=iter, epoch=epoch)
        if not self.training:
            return feat
        model_loss = self.sup_weight * results["sup-loss"]
        if epoch > self.pretrain_classifier_epoch:
            model_loss = model_loss + self.reg_weight * results["reg-loss"]
        results["loss"] = model_loss
        return (feat, results)


# ---------------------------------------------------------------------------
# Pure-JAX reference (mirrors the kernel's bf16 quantization points)
# ---------------------------------------------------------------------------
def _reference(model, img1, img2, label):
    c_hidden, n_cls, c_in = model.c_hidden, model.n_cls, model.c_in
    w1 = model.w1.astype(jnp.float32).reshape(c_hidden, 3, 3, _C_PAD)[..., :c_in]
    w1 = jnp.transpose(w1, (0, 3, 1, 2))                    # OIHW
    w2 = model.w2.astype(jnp.float32)
    b1 = model.b1[:, 0]
    b2 = model.b2[:, 0]

    def fwd(img):
        x = img.astype(jnp.bfloat16).astype(jnp.float32)    # match kernel input rounding
        y = jax.lax.conv_general_dilated(
            x, w1, window_strides=(1, 1), padding=((1, 1), (1, 1)),
            dimension_numbers=("NCHW", "OIHW", "NCHW"),
            precision=jax.lax.Precision.HIGHEST)
        feat = jnp.maximum(y + b1[None, :, None, None], 0.0)
        fb = feat.astype(jnp.bfloat16).astype(jnp.float32)   # match in-kernel cast
        logits = jnp.einsum("oc,bchw->bohw", w2, fb,
                            precision=jax.lax.Precision.HIGHEST)
        return feat, logits + b2[None, :, None, None]

    feat1, lg1 = fwd(img1)
    _, lg2 = fwd(img2)
    bl = label.shape[0]
    sup = jnp.mean((lg1[:bl] - label) ** 2)
    reg = jnp.mean((lg1 - lg2) ** 2)
    return feat1, sup, reg


# ---------------------------------------------------------------------------
if __name__ == "__main__":
    key = jax.random.PRNGKey(0)
    k_img1, k_img2, k_label, k_param = jax.random.split(key, 4)

    b, c_in, h, w = 2, 3, 16, 16
    n_cls = 3          # label per docstring: (b * label_ratio, 3, h, w)
    bl = 1             # label_ratio = 0.5

    img1 = jax.random.normal(k_img1, (b, c_in, h, w), jnp.float32)
    img2 = jax.random.normal(k_img2, (b, c_in, h, w), jnp.float32)
    label = jax.random.normal(k_label, (bl, n_cls, h, w), jnp.float32)

    model = Consistency(k_param, c_in=c_in, c_hidden=32, n_cls=n_cls)
    wrapper = ConsistencyWrapper(
        cfg={"pretrain_classifier_epoch": 2},
        cfg_loss={"reg_weight": 0.5, "sup_weight": 1.0},
        model=model,
    )

    # Training path with augmentation (pair kernel).
    feat, results = wrapper.forward(img1, label, img2=img2, epoch=5)
    jax.block_until_ready((feat, results["loss"],
                           results["sup-loss"], results["reg-loss"]))
    assert feat.shape == (b, 32, h, w)

    # Correctness check vs pure-JAX reference (bf16-matched quantization).
    ref_feat, ref_sup, ref_reg = _reference(model, img1, img2, label)
    np.testing.assert_allclose(np.asarray(feat), np.asarray(ref_feat),
                               rtol=1e-2, atol=1e-2)
    np.testing.assert_allclose(float(results["sup-loss"]), float(ref_sup), rtol=1e-2)
    np.testing.assert_allclose(float(results["reg-loss"]), float(ref_reg), rtol=1e-2)

    # Training path without augmentation (sup-only kernel variant).
    feat2, results2 = wrapper.forward(img1, label, epoch=1)
    jax.block_until_ready((feat2, results2["loss"]))
    np.testing.assert_allclose(float(results2["sup-loss"]), float(ref_sup), rtol=1e-2)

    # Eval path: returns feat only.
    wrapper.training = False
    feat_eval = wrapper.forward(img1, label, img2=img2, epoch=5)
    jax.block_until_ready(feat_eval)

    print("KERNEL_OK")
</pallas_src>

<mosaic_0001>
module attributes {stable_mosaic.version = 11 : i64} {
  func.func @_consistency_kernel_pair(%arg0: i32, %arg1: memref<1x8x422xbf16, #tpu.memory_space<vmem>>, %arg2: memref<1x8x422xbf16, #tpu.memory_space<vmem>>, %arg3: memref<1x3x384xf32, #tpu.memory_space<vmem>>, %arg4: memref<3x384xf32, #tpu.memory_space<vmem>>, %arg5: memref<32x72xbf16, #tpu.memory_space<vmem>>, %arg6: memref<32x1xf32, #tpu.memory_space<vmem>>, %arg7: memref<3x32xbf16, #tpu.memory_space<vmem>>, %arg8: memref<3x1xf32, #tpu.memory_space<vmem>>, %arg9: memref<1x32x384xf32, #tpu.memory_space<vmem>>, %arg10: memref<1x2x128xf32, #tpu.memory_space<vmem>>, %arg11: memref<72x768xbf16, #tpu.memory_space<vmem>>) attributes {dimension_semantics = [#tpu.dimension_semantics<parallel>], iteration_bounds = array<i64: 2>, scalar_prefetch = 0 : i64, scratch_operands = 1 : i64, tpu.core_type = #tpu.core_type<tc>, window_params = [{transform_indices = @transform_0, window_bounds = array<i64: 1, 8, 422>}, {transform_indices = @transform_1, window_bounds = array<i64: 1, 8, 422>}, {transform_indices = @transform_2, window_bounds = array<i64: 1, 3, 384>}, {pipeline_mode = #tpu.pipeline_mode<synchronous>, transform_indices = @transform_3, window_bounds = array<i64: 3, 384>}, {pipeline_mode = #tpu.pipeline_mode<synchronous>, transform_indices = @transform_4, window_bounds = array<i64: 32, 72>}, {pipeline_mode = #tpu.pipeline_mode<synchronous>, transform_indices = @transform_5, window_bounds = array<i64: 32, 1>}, {pipeline_mode = #tpu.pipeline_mode<synchronous>, transform_indices = @transform_6, window_bounds = array<i64: 3, 32>}, {pipeline_mode = #tpu.pipeline_mode<synchronous>, transform_indices = @transform_7, window_bounds = array<i64: 3, 1>}, {transform_indices = @transform_8, window_bounds = array<i64: 1, 32, 384>}, {transform_indices = @transform_9, window_bounds = array<i64: 1, 2, 128>}]} {
    %c0 = arith.constant 0 : index
    %c0_0 = arith.constant 0 : index
    %c0_1 = arith.constant 0 : index
    %0 = vector.load %arg1[%c0, %c0_0, %c0_1] : memref<1x8x422xbf16, #tpu.memory_space<vmem>>, vector<1x8x422xbf16>
    %1 = vector.shape_cast %0 : vector<1x8x422xbf16> to vector<8x422xbf16>
    %2 = vector.extract_strided_slice %1 {offsets = [0, 0], sizes = [8, 384], strides = [1, 1]} : vector<8x422xbf16> to vector<8x384xbf16>
    %c0_2 = arith.constant 0 : index
    %c0_3 = arith.constant 0 : index
    %3 = vector.load %arg11[%c0_2, %c0_3] : memref<72x768xbf16, #tpu.memory_space<vmem>>, vector<8x384xbf16>
    tpu.vector_store %arg11[%c0_2, %c0_3], %2 {strides = array<i32>} : memref<72x768xbf16, #tpu.memory_space<vmem>>, vector<8x384xbf16>,
    %4 = vector.extract_strided_slice %1 {offsets = [0, 1], sizes = [8, 384], strides = [1, 1]} : vector<8x422xbf16> to vector<8x384xbf16>
    %c8 = arith.constant 8 : index
    %c0_4 = arith.constant 0 : index
    %5 = vector.load %arg11[%c8, %c0_4] : memref<72x768xbf16, #tpu.memory_space<vmem>>, vector<8x384xbf16>
    tpu.vector_store %arg11[%c8, %c0_4], %4 {strides = array<i32>} : memref<72x768xbf16, #tpu.memory_space<vmem>>, vector<8x384xbf16>,
    %6 = vector.extract_strided_slice %1 {offsets = [0, 2], sizes = [8, 384], strides = [1, 1]} : vector<8x422xbf16> to vector<8x384xbf16>
    %c16 = arith.constant 16 : index
    %c0_5 = arith.constant 0 : index
    %7 = vector.load %arg11[%c16, %c0_5] : memref<72x768xbf16, #tpu.memory_space<vmem>>, vector<8x384xbf16>
    tpu.vector_store %arg11[%c16, %c0_5], %6 {strides = array<i32>} : memref<72x768xbf16, #tpu.memory_space<vmem>>, vector<8x384xbf16>,
    %8 = vector.extract_strided_slice %1 {offsets = [0, 18], sizes = [8, 384], strides = [1, 1]} : vector<8x422xbf16> to vector<8x384xbf16>
    %c24 = arith.constant 24 : index
    %c0_6 = arith.constant 0 : index
    %9 = vector.load %arg11[%c24, %c0_6] : memref<72x768xbf16, #tpu.memory_space<vmem>>, vector<8x384xbf16>
    tpu.vector_store %arg11[%c24, %c0_6], %8 {strides = array<i32>} : memref<72x768xbf16, #tpu.memory_space<vmem>>, vector<8x384xbf16>,
    %10 = vector.extract_strided_slice %1 {offsets = [0, 19], sizes = [8, 384], strides = [1, 1]} : vector<8x422xbf16> to vector<8x384xbf16>
    %c32 = arith.constant 32 : index
    %c0_7 = arith.constant 0 : index
    %11 = vector.load %arg11[%c32, %c0_7] : memref<72x768xbf16, #tpu.memory_space<vmem>>, vector<8x384xbf16>
    tpu.vector_store %arg11[%c32, %c0_7], %10 {strides = array<i32>} : memref<72x768xbf16, #tpu.memory_space<vmem>>, vector<8x384xbf16>,
    %12 = vector.extract_strided_slice %1 {offsets = [0, 20], sizes = [8, 384], strides = [1, 1]} : vector<8x422xbf16> to vector<8x384xbf16>
    %c40 = arith.constant 40 : index
    %c0_8 = arith.constant 0 : index
    %13 = vector.load %arg11[%c40, %c0_8] : memref<72x768xbf16, #tpu.memory_space<vmem>>, vector<8x384xbf16>
    tpu.vector_store %arg11[%c40, %c0_8], %12 {strides = array<i32>} : memref<72x768xbf16, #tpu.memory_space<vmem>>, vector<8x384xbf16>,
    %14 = vector.extract_strided_slice %1 {offsets = [0, 36], sizes = [8, 384], strides = [1, 1]} : vector<8x422xbf16> to vector<8x384xbf16>
    %c48 = arith.constant 48 : index
    %c0_9 = arith.constant 0 : index
    %15 = vector.load %arg11[%c48, %c0_9] : memref<72x768xbf16, #tpu.memory_space<vmem>>, vector<8x384xbf16>
    tpu.vector_store %arg11[%c48, %c0_9], %14 {strides = array<i32>} : memref<72x768xbf16, #tpu.memory_space<vmem>>, vector<8x384xbf16>,
    %16 = vector.extract_strided_slice %1 {offsets = [0, 37], sizes = [8, 384], strides = [1, 1]} : vector<8x422xbf16> to vector<8x384xbf16>
    %c56 = arith.constant 56 : index
    %c0_10 = arith.constant 0 : index
    %17 = vector.load %arg11[%c56, %c0_10] : memref<72x768xbf16, #tpu.memory_space<vmem>>, vector<8x384xbf16>
    tpu.vector_store %arg11[%c56, %c0_10], %16 {strides = array<i32>} : memref<72x768xbf16, #tpu.memory_space<vmem>>, vector<8x384xbf16>,
    %18 = vector.extract_strided_slice %1 {offsets = [0, 38], sizes = [8, 384], strides = [1, 1]} : vector<8x422xbf16> to vector<8x384xbf16>
    %c64 = arith.constant 64 : index
    %c0_11 = arith.constant 0 : index
    %19 = vector.load %arg11[%c64, %c0_11] : memref<72x768xbf16, #tpu.memory_space<vmem>>, vector<8x384xbf16>
    tpu.vector_store %arg11[%c64, %c0_11], %18 {strides = array<i32>} : memref<72x768xbf16, #tpu.memory_space<vmem>>, vector<8x384xbf16>,
    %c0_12 = arith.constant 0 : index
    %c0_13 = arith.constant 0 : index
    %c0_14 = arith.constant 0 : index
    %20 = vector.load %arg2[%c0_12, %c0_13, %c0_14] : memref<1x8x422xbf16, #tpu.memory_space<vmem>>, vector<1x8x422xbf16>
    %21 = vector.shape_cast %20 : vector<1x8x422xbf16> to vector<8x422xbf16>
    %22 = vector.extract_strided_slice %21 {offsets = [0, 0], sizes = [8, 384], strides = [1, 1]} : vector<8x422xbf16> to vector<8x384xbf16>
    %c0_15 = arith.constant 0 : index
    %c384 = arith.constant 384 : index
    %23 = vector.load %arg11[%c0_15, %c384] : memref<72x768xbf16, #tpu.memory_space<vmem>>, vector<8x384xbf16>
    tpu.vector_store %arg11[%c0_15, %c384], %22 {strides = array<i32>} : memref<72x768xbf16, #tpu.memory_space<vmem>>, vector<8x384xbf16>,
    %24 = vector.extract_strided_slice %21 {offsets = [0, 1], sizes = [8, 384], strides = [1, 1]} : vector<8x422xbf16> to vector<8x384xbf16>
    %c8_16 = arith.constant 8 : index
    %c384_17 = arith.constant 384 : index
    %25 = vector.load %arg11[%c8_16, %c384_17] : memref<72x768xbf16, #tpu.memory_space<vmem>>, vector<8x384xbf16>
    tpu.vector_store %arg11[%c8_16, %c384_17], %24 {strides = array<i32>} : memref<72x768xbf16, #tpu.memory_space<vmem>>, vector<8x384xbf16>,
    %26 = vector.extract_strided_slice %21 {offsets = [0, 2], sizes = [8, 384], strides = [1, 1]} : vector<8x422xbf16> to vector<8x384xbf16>
    %c16_18 = arith.constant 16 : index
    %c384_19 = arith.constant 384 : index
    %27 = vector.load %arg11[%c16_18, %c384_19] : memref<72x768xbf16, #tpu.memory_space<vmem>>, vector<8x384xbf16>
    tpu.vector_store %arg11[%c16_18, %c384_19], %26 {strides = array<i32>} : memref<72x768xbf16, #tpu.memory_space<vmem>>, vector<8x384xbf16>,
    %28 = vector.extract_strided_slice %21 {offsets = [0, 18], sizes = [8, 384], strides = [1, 1]} : vector<8x422xbf16> to vector<8x384xbf16>
    %c24_20 = arith.constant 24 : index
    %c384_21 = arith.constant 384 : index
    %29 = vector.load %arg11[%c24_20, %c384_21] : memref<72x768xbf16, #tpu.memory_space<vmem>>, vector<8x384xbf16>
    tpu.vector_store %arg11[%c24_20, %c384_21], %28 {strides = array<i32>} : memref<72x768xbf16, #tpu.memory_space<vmem>>, vector<8x384xbf16>,
    %30 = vector.extract_strided_slice %21 {offsets = [0, 19], sizes = [8, 384], strides = [1, 1]} : vector<8x422xbf16> to vector<8x384xbf16>
    %c32_22 = arith.constant 32 : index
    %c384_23 = arith.constant 384 : index
    %31 = vector.load %arg11[%c32_22, %c384_23] : memref<72x768xbf16, #tpu.memory_space<vmem>>, vector<8x384xbf16>
    tpu.vector_store %arg11[%c32_22, %c384_23], %30 {strides = array<i32>} : memref<72x768xbf16, #tpu.memory_space<vmem>>, vector<8x384xbf16>,
    %32 = vector.extract_strided_slice %21 {offsets = [0, 20], sizes = [8, 384], strides = [1, 1]} : vector<8x422xbf16> to vector<8x384xbf16>
    %c40_24 = arith.constant 40 : index
    %c384_25 = arith.constant 384 : index
    %33 = vector.load %arg11[%c40_24, %c384_25] : memref<72x768xbf16, #tpu.memory_space<vmem>>, vector<8x384xbf16>
    tpu.vector_store %arg11[%c40_24, %c384_25], %32 {strides = array<i32>} : memref<72x768xbf16, #tpu.memory_space<vmem>>, vector<8x384xbf16>,
    %34 = vector.extract_strided_slice %21 {offsets = [0, 36], sizes = [8, 384], strides = [1, 1]} : vector<8x422xbf16> to vector<8x384xbf16>
    %c48_26 = arith.constant 48 : index
    %c384_27 = arith.constant 384 : index
    %35 = vector.load %arg11[%c48_26, %c384_27] : memref<72x768xbf16, #tpu.memory_space<vmem>>, vector<8x384xbf16>
    tpu.vector_store %arg11[%c48_26, %c384_27], %34 {strides = array<i32>} : memref<72x768xbf16, #tpu.memory_space<vmem>>, vector<8x384xbf16>,
    %36 = vector.extract_strided_slice %21 {offsets = [0, 37], sizes = [8, 384], strides = [1, 1]} : vector<8x422xbf16> to vector<8x384xbf16>
    %c56_28 = arith.constant 56 : index
    %c384_29 = arith.constant 384 : index
    %37 = vector.load %arg11[%c56_28, %c384_29] : memref<72x768xbf16, #tpu.memory_space<vmem>>, vector<8x384xbf16>
    tpu.vector_store %arg11[%c56_28, %c384_29], %36 {strides = array<i32>} : memref<72x768xbf16, #tpu.memory_space<vmem>>, vector<8x384xbf16>,
    %38 = vector.extract_strided_slice %21 {offsets = [0, 38], sizes = [8, 384], strides = [1, 1]} : vector<8x422xbf16> to vector<8x384xbf16>
    %c64_30 = arith.constant 64 : index
    %c384_31 = arith.constant 384 : index
    %39 = vector.load %arg11[%c64_30, %c384_31] : memref<72x768xbf16, #tpu.memory_space<vmem>>, vector<8x384xbf16>
    tpu.vector_store %arg11[%c64_30, %c384_31], %38 {strides = array<i32>} : memref<72x768xbf16, #tpu.memory_space<vmem>>, vector<8x384xbf16>,
    %c0_32 = arith.constant 0 : index
    %c0_33 = arith.constant 0 : index
    %40 = vector.load %arg11[%c0_32, %c0_33] : memref<72x768xbf16, #tpu.memory_space<vmem>>, vector<72x768xbf16>
    %c0_34 = arith.constant 0 : index
    %c0_35 = arith.constant 0 : index
    %41 = vector.load %arg5[%c0_34, %c0_35] : memref<32x72xbf16, #tpu.memory_space<vmem>>, vector<32x72xbf16>
    %c0_36 = arith.constant 0 : index
    %c0_37 = arith.constant 0 : index
    %42 = vector.load %arg6[%c0_36, %c0_37] : memref<32x1xf32, #tpu.memory_space<vmem>>, vector<32x1xf32>
    %c0_38 = arith.constant 0 : index
    %c0_39 = arith.constant 0 : index
    %43 = vector.load %arg7[%c0_38, %c0_39] : memref<3x32xbf16, #tpu.memory_space<vmem>>, vector<3x32xbf16>
    %c0_40 = arith.constant 0 : index
    %c0_41 = arith.constant 0 : index
    %44 = vector.load %arg8[%c0_40, %c0_41] : memref<3x1xf32, #tpu.memory_space<vmem>>, vector<3x1xf32>
    %cst = arith.constant dense<0.000000e+00> : vector<32x768xf32>
    %45 = tpu.matmul %41, %40, %cst {dimension_numbers = #tpu.dot_dimension_numbers<[1], [0], [0], [1], [0, 0, 1, 1], [], []>} : vector<32x72xbf16>, vector<72x768xbf16>, vector<32x768xf32> -> vector<32x768xf32>
    %46 = vector.broadcast %42 : vector<32x1xf32> to vector<32x768xf32>
    %47 = arith.addf %45, %46 : vector<32x768xf32>
    %cst_42 = arith.constant 0.000000e+00 : f32
    %48 = vector.broadcast %cst_42 : f32 to vector<32x768xf32>
    %49 = arith.maximumf %47, %48 : vector<32x768xf32>
    %50 = arith.truncf %49 : vector<32x768xf32> to vector<32x768xbf16>
    %cst_43 = arith.constant dense<0.000000e+00> : vector<3x768xf32>
    %51 = tpu.matmul %43, %50, %cst_43 {dimension_numbers = #tpu.dot_dimension_numbers<[1], [0], [0], [1], [0, 0, 1, 1], [], []>} : vector<3x32xbf16>, vector<32x768xbf16>, vector<3x768xf32> -> vector<3x768xf32>
    %52 = vector.broadcast %44 : vector<3x1xf32> to vector<3x768xf32>
    %53 = arith.addf %51, %52 : vector<3x768xf32>
    %54 = vector.extract_strided_slice %49 {offsets = [0, 0], sizes = [32, 384], strides = [1, 1]} : vector<32x768xf32> to vector<32x384xf32>
    %c0_44 = arith.constant 0 : index
    %c0_45 = arith.constant 0 : index
    %c0_46 = arith.constant 0 : index
    %55 = vector.load %arg9[%c0_44, %c0_45, %c0_46] : memref<1x32x384xf32, #tpu.memory_space<vmem>>, vector<1x32x384xf32>
    %56 = vector.shape_cast %55 : vector<1x32x384xf32> to vector<32x384xf32>
    %57 = vector.shape_cast %54 : vector<32x384xf32> to vector<1x32x384xf32>
    tpu.vector_store %arg9[%c0_44, %c0_45, %c0_46], %57 {strides = array<i32>} : memref<1x32x384xf32, #tpu.memory_space<vmem>>, vector<1x32x384xf32>,
    %c0_47 = arith.constant 0 : index
    %c0_48 = arith.constant 0 : index
    %58 = vector.load %arg4[%c0_47, %c0_48] : memref<3x384xf32, #tpu.memory_space<vmem>>, vector<3x384xf32>
    %59 = vector.extract_strided_slice %53 {offsets = [0, 0], sizes = [3, 384], strides = [1, 1]} : vector<3x768xf32> to vector<3x384xf32>
    %60 = vector.extract_strided_slice %53 {offsets = [0, 384], sizes = [3, 384], strides = [1, 1]} : vector<3x768xf32> to vector<3x384xf32>
    %61 = arith.subf %59, %60 : vector<3x384xf32>
    %62 = arith.mulf %61, %61 : vector<3x384xf32>
    %63 = arith.mulf %62, %58 : vector<3x384xf32>
    %64 = vector.shape_cast %63 : vector<3x384xf32> to vector<1x3x384xf32>
    %cst_49 = arith.constant dense<0.000000e+00> : vector<1xf32>
    %65 = vector.multi_reduction <add>, %64, %cst_49 [1, 2] : vector<1x3x384xf32> to vector<1xf32>
    %66 = vector.shape_cast %65 : vector<1xf32> to vector<1x1x1xf32>
    %67 = vector.extract %66[0, 0, 0] : f32 from vector<1x1x1xf32>
    %c0_50 = arith.constant 0 : index
    %c0_51 = arith.constant 0 : index
    %c0_52 = arith.constant 0 : index
    %68 = vector.load %arg3[%c0_50, %c0_51, %c0_52] : memref<1x3x384xf32, #tpu.memory_space<vmem>>, vector<1x3x384xf32>
    %69 = vector.shape_cast %68 : vector<1x3x384xf32> to vector<3x384xf32>
    %70 = arith.subf %59, %69 : vector<3x384xf32>
    %71 = arith.mulf %70, %70 : vector<3x384xf32>
    %72 = arith.mulf %71, %58 : vector<3x384xf32>
    %73 = vector.shape_cast %72 : vector<3x384xf32> to vector<1x3x384xf32>
    %cst_53 = arith.constant dense<0.000000e+00> : vector<1xf32>
    %74 = vector.multi_reduction <add>, %73, %cst_53 [1, 2] : vector<1x3x384xf32> to vector<1xf32>
    %75 = vector.shape_cast %74 : vector<1xf32> to vector<1x1x1xf32>
    %76 = vector.extract %75[0, 0, 0] : f32 from vector<1x1x1xf32>
    %c1_i32 = arith.constant 1 : i32
    %77 = arith.cmpi slt, %arg0, %c1_i32 : i32
    %78 = arith.extui %77 : i1 to i32
    %79 = arith.sitofp %78 : i32 to f32
    %80 = arith.mulf %76, %79 : f32
    %81 = tpu.iota {dimensions = array<i32: 0>} : vector<2x128xi32>
    %c0_i32 = arith.constant 0 : i32
    %82 = vector.broadcast %c0_i32 : i32 to vector<2x128xi32>
    %83 = arith.cmpi eq, %81, %82 : vector<2x128xi32>
    %84 = vector.broadcast %80 : f32 to vector<2x128xf32>
    %85 = vector.broadcast %67 : f32 to vector<2x128xf32>
    %86 = arith.select %83, %84, %85 : vector<2x128xi1>, vector<2x128xf32>
    %c0_54 = arith.constant 0 : index
    %c0_55 = arith.constant 0 : index
    %c0_56 = arith.constant 0 : index
    %87 = vector.load %arg10[%c0_54, %c0_55, %c0_56] : memref<1x2x128xf32, #tpu.memory_space<vmem>>, vector<1x2x128xf32>
    %88 = vector.shape_cast %87 : vector<1x2x128xf32> to vector<2x128xf32>
    %89 = vector.shape_cast %86 : vector<2x128xf32> to vector<1x2x128xf32>
    tpu.vector_store %arg10[%c0_54, %c0_55, %c0_56], %89 {strides = array<i32>} : memref<1x2x128xf32, #tpu.memory_space<vmem>>, vector<1x2x128xf32>,
    return
  }
  func.func @transform_0(%arg0: i32) -> (i32, i32, i32) {
    %c0_i32 = arith.constant 0 : i32
    %c0_i32_0 = arith.constant 0 : i32
    %c0_i32_1 = arith.constant 0 : i32
    return %arg0, %c0_i32, %c0_i32_0 : i32, i32, i32
  }
  func.func @transform_1(%arg0: i32) -> (i32, i32, i32) {
    %c0_i32 = arith.constant 0 : i32
    %c0_i32_0 = arith.constant 0 : i32
    %c0_i32_1 = arith.constant 0 : i32
    return %arg0, %c0_i32, %c0_i32_0 : i32, i32, i32
  }
  func.func @transform_2(%arg0: i32) -> (i32, i32, i32) {
    %c0_i32 = arith.constant 0 : i32
    %0 = arith.minsi %arg0, %c0_i32 : i32
    %c0_i32_0 = arith.constant 0 : i32
    %c0_i32_1 = arith.constant 0 : i32
    %c0_i32_2 = arith.constant 0 : i32
    return %0, %c0_i32_0, %c0_i32_1 : i32, i32, i32
  }
  func.func @transform_3(%arg0: i32) -> (i32, i32) {
    %c0_i32 = arith.constant 0 : i32
    %c0_i32_0 = arith.constant 0 : i32
    %c0_i32_1 = arith.constant 0 : i32
    return %c0_i32, %c0_i32_0 : i32, i32
  }
  func.func @transform_4(%arg0: i32) -> (i32, i32) {
    %c0_i32 = arith.constant 0 : i32
    %c0_i32_0 = arith.constant 0 : i32
    %c0_i32_1 = arith.constant 0 : i32
    return %c0_i32, %c0_i32_0 : i32, i32
  }
  func.func @transform_5(%arg0: i32) -> (i32, i32) {
    %c0_i32 = arith.constant 0 : i32
    %c0_i32_0 = arith.constant 0 : i32
    %c0_i32_1 = arith.constant 0 : i32
    return %c0_i32, %c0_i32_0 : i32, i32
  }
  func.func @transform_6(%arg0: i32) -> (i32, i32) {
    %c0_i32 = arith.constant 0 : i32
    %c0_i32_0 = arith.constant 0 : i32
    %c0_i32_1 = arith.constant 0 : i32
    return %c0_i32, %c0_i32_0 : i32, i32
  }
  func.func @transform_7(%arg0: i32) -> (i32, i32) {
    %c0_i32 = arith.constant 0 : i32
    %c0_i32_0 = arith.constant 0 : i32
    %c0_i32_1 = arith.constant 0 : i32
    return %c0_i32, %c0_i32_0 : i32, i32
  }
  func.func @transform_8(%arg0: i32) -> (i32, i32, i32) {
    %c0_i32 = arith.constant 0 : i32
    %c0_i32_0 = arith.constant 0 : i32
    %c0_i32_1 = arith.constant 0 : i32
    return %arg0, %c0_i32, %c0_i32_0 : i32, i32, i32
  }
  func.func @transform_9(%arg0: i32) -> (i32, i32, i32) {
    %c0_i32 = arith.constant 0 : i32
    %c0_i32_0 = arith.constant 0 : i32
    %c0_i32_1 = arith.constant 0 : i32
    return %arg0, %c0_i32, %c0_i32_0 : i32, i32, i32
  }
}

</mosaic_0001>

<llo_original>
// kernel: _consistency_apply_pair.1
$region0: #{_consistency_apply_pair.1}
  #allocation0 [shape = 'u32[]', space=smem, size = 0x4, offset = 0x4, fixed_abs, tag = 'smem constant byte address 0x4 - core index']
  #allocation1 [shape = 'u32[72,128]{1,0:T(1,128)}', space=vmem, size = 0x9000, scoped, tag = 'internal scratch']
  #allocation2 [shape = 'bf16[72,768]{1,0:T(8,128)(2,1)}', space=vmem, size = 0x1b000, scoped, tag = 'scratch operand']
  %s0 = inlined_call_operand.vmem [shape: bf16[2,8,422], index: 0, kind: input, shape index: {}]
  %s1 = inlined_call_operand.vmem [shape: bf16[2,8,422], index: 1, kind: input, shape index: {}]
  %s2 = inlined_call_operand.vmem [shape: f32[1,3,384], index: 2, kind: input, shape index: {}]
  %s3 = inlined_call_operand.vmem [shape: f32[3,384], index: 3, kind: input, shape index: {}]
  %s4 = inlined_call_operand.vmem [shape: bf16[32,72], index: 4, kind: input, shape index: {}]
  %s5 = inlined_call_operand.vmem [shape: f32[32,1], index: 5, kind: input, shape index: {}]
  %s6 = inlined_call_operand.vmem [shape: bf16[3,32], index: 6, kind: input, shape index: {}]
  %s7 = inlined_call_operand.vmem [shape: f32[3,1], index: 7, kind: input, shape index: {}]
  %s8 = inlined_call_operand.vmem [shape: f32[2,32,384], index: 8, kind: output, shape index: {0}]
  %s9 = inlined_call_operand.vmem [shape: f32[2,2,128], index: 9, kind: output, shape index: {1}]
  %10 = xla_tuple %s8, %s9
  %s11 = sld [smem:[#allocation0]]
  $region73: #{_consistency_apply_pair.1} parent=0
    _
  %s13 = ssub.s32 1, %s11
  %s14 = scalar_select 0, %s13, %s11
  loop: start=0, step=1, limit=4
  $region2: #{_consistency_apply_pair.1} parent=0 // loop_pre_header
    _
  $region3: #{_consistency_apply_pair.1} parent=0 // loop_header
    %s16 = sphi 0, %s20
    %p17 = scmp.ge.s32.totalorder %s16, 4
    %s26 = sphi 0, %s28
    %s29 = sphi 0, %s26
    %s30 = sphi 0, %s29
    %s46 = sphi 0, %s30
    %s52 = sphi 0, %s54
    %s55 = sphi 0, %s52
    %s56 = sphi 0, %s55
    %s72 = sphi 0, %s56
    %s82 = sphi 0, %s84
    %s85 = sphi 0, %s82
    %s86 = sphi 0, %s85
    %s102 = sphi 0, %s86
    %s106 = sphi 0, %s106
    %s108 = sphi 0, %s106
    %s109 = sphi 0, %s108
    %s123 = sphi 0, %s109
    %s127 = sphi 0, %s127
    %s129 = sphi 0, %s127
    %s130 = sphi 0, %s129
    %s144 = sphi 0, %s130
    %s148 = sphi 0, %s148
    %s150 = sphi 0, %s148
    %s151 = sphi 0, %s150
    %s165 = sphi 0, %s151
    %s169 = sphi 0, %s169
    %s171 = sphi 0, %s169
    %s172 = sphi 0, %s171
    %s186 = sphi 0, %s172
    %s190 = sphi 0, %s190
    %s192 = sphi 0, %s190
    %s193 = sphi 0, %s192
    %s207 = sphi 0, %s193
    %s213 = sphi 0, %s215
    %s216 = sphi 0, %s213
    %s217 = sphi 0, %s216
    %s233 = sphi 0, %s217
    %s239 = sphi 0, %s241
    %s242 = sphi 0, %s239
    %s243 = sphi 0, %s242
    %s259 = sphi 0, %s243
  $region4: #{_consistency_apply_pair.1} parent=0 // loop_header_branch
    %19 = sbr.rel (%p17) target = $region8
  $region5: #{_consistency_apply_pair.1} parent=0 // loop_body
    %s21 = ssub.s32 %s16, 1
    %s22 = ssub.s32 %s16, 2
    %s23 = sadd.s32 %s16, 1
    %s24 = ssub.s32 %s16, %s23
    %p25 = scmp.eq.s32.totalorder %s24, 0
    %s27 = sadd.s32 %s26, 1
    %s28 = scalar_select %p25, %s26, %s27
    %p31 = pneg %p25
    %p32 = scmp.eq.s32.totalorder %s16, 1
    %p33 = por %p31, %p32
    %p34 = scmp.ne.s32.totalorder %s26, %s29
    %p35 = scmp.eq.s32.totalorder %s16, 0
    %p36 = por %p34, %p35
    %p37 = scmp.ne.s32.totalorder %s26, %s29
    %p38 = scmp.eq.s32.totalorder %s21, 1
    %p39 = por %p37, %p38
    %p40 = scmp.ne.s32.totalorder %s29, %s30
    %p41 = scmp.eq.s32.totalorder %s21, 0
    %p42 = por %p40, %p41
    %p43 = scmp.ne.s32.totalorder %s29, %s30
    %p44 = scmp.eq.s32.totalorder %s22, 1
    %p45 = por %p43, %p44
    %p47 = scmp.ne.s32.totalorder %s30, %s46
    %p48 = scmp.eq.s32.totalorder %s22, 0
    %p49 = por %p47, %p48
    %s50 = ssub.s32 %s16, %s23
    %p51 = scmp.eq.s32.totalorder %s50, 0
    %s53 = sadd.s32 %s52, 1
    %s54 = scalar_select %p51, %s52, %s53
    %p57 = pneg %p51
    %p58 = scmp.eq.s32.totalorder %s16, 1
    %p59 = por %p57, %p58
    %p60 = scmp.ne.s32.totalorder %s52, %s55
    %p61 = scmp.eq.s32.totalorder %s16, 0
    %p62 = por %p60, %p61
    %p63 = scmp.ne.s32.totalorder %s52, %s55
    %p64 = scmp.eq.s32.totalorder %s21, 1
    %p65 = por %p63, %p64
    %p66 = scmp.ne.s32.totalorder %s55, %s56
    %p67 = scmp.eq.s32.totalorder %s21, 0
    %p68 = por %p66, %p67
    %p69 = scmp.ne.s32.totalorder %s55, %s56
    %p70 = scmp.eq.s32.totalorder %s22, 1
    %p71 = por %p69, %p70
    %p73 = scmp.ne.s32.totalorder %s56, %s72
    %p74 = scmp.eq.s32.totalorder %s22, 0
    %p75 = por %p73, %p74
    %p76 = scmp.lt.s32.totalorder %s16, 0
    %s77 = scalar_select %p76, %s16, 0
    %p78 = scmp.lt.s32.totalorder %s23, 0
    %s79 = scalar_select %p78, %s23, 0
    %s80 = ssub.s32 %s77, %s79
    %p81 = scmp.eq.s32.totalorder %s80, 0
    %s83 = sadd.s32 %s82, 1
    %s84 = scalar_select %p81, %s82, %s83
    %p87 = pneg %p81
    %p88 = scmp.eq.s32.totalorder %s16, 1
    %p89 = por %p87, %p88
    %p90 = scmp.ne.s32.totalorder %s82, %s85
    %p91 = scmp.eq.s32.totalorder %s16, 0
    %p92 = por %p90, %p91
    %p93 = scmp.ne.s32.totalorder %s82, %s85
    %p94 = scmp.eq.s32.totalorder %s21, 1
    %p95 = por %p93, %p94
    %p96 = scmp.ne.s32.totalorder %s85, %s86
    %p97 = scmp.eq.s32.totalorder %s21, 0
    %p98 = por %p96, %p97
    %p99 = scmp.ne.s32.totalorder %s85, %s86
    %p100 = scmp.eq.s32.totalorder %s22, 1
    %p101 = por %p99, %p100
    %p103 = scmp.ne.s32.totalorder %s86, %s102
    %p104 = scmp.eq.s32.totalorder %s22, 0
    %p105 = por %p103, %p104
    %s107 = sadd.s32 %s106, 1
    %p110 = scmp.eq.s32.totalorder %s16, 1
    %p111 = scmp.ne.s32.totalorder %s106, %s108
    %p112 = scmp.eq.s32.totalorder %s16, 0
    %p113 = por %p111, %p112
    %p114 = scmp.ne.s32.totalorder %s106, %s108
    %p115 = scmp.eq.s32.totalorder %s21, 1
    %p116 = por %p114, %p115
    %p117 = scmp.ne.s32.totalorder %s108, %s109
    %p118 = scmp.eq.s32.totalorder %s21, 0
    %p119 = por %p117, %p118
    %p120 = scmp.ne.s32.totalorder %s108, %s109
    %p121 = scmp.eq.s32.totalorder %s22, 1
    %p122 = por %p120, %p121
    %p124 = scmp.ne.s32.totalorder %s109, %s123
    %p125 = scmp.eq.s32.totalorder %s22, 0
    %p126 = por %p124, %p125
    %s128 = sadd.s32 %s127, 1
    %p131 = scmp.eq.s32.totalorder %s16, 1
    %p132 = scmp.ne.s32.totalorder %s127, %s129
    %p133 = scmp.eq.s32.totalorder %s16, 0
    %p134 = por %p132, %p133
    %p135 = scmp.ne.s32.totalorder %s127, %s129
    %p136 = scmp.eq.s32.totalorder %s21, 1
    %p137 = por %p135, %p136
    %p138 = scmp.ne.s32.totalorder %s129, %s130
    %p139 = scmp.eq.s32.totalorder %s21, 0
    %p140 = por %p138, %p139
    %p141 = scmp.ne.s32.totalorder %s129, %s130
    %p142 = scmp.eq.s32.totalorder %s22, 1
    %p143 = por %p141, %p142
    %p145 = scmp.ne.s32.totalorder %s130, %s144
    %p146 = scmp.eq.s32.totalorder %s22, 0
    %p147 = por %p145, %p146
    %s149 = sadd.s32 %s148, 1
    %p152 = scmp.eq.s32.totalorder %s16, 1
    %p153 = scmp.ne.s32.totalorder %s148, %s150
    %p154 = scmp.eq.s32.totalorder %s16, 0
    %p155 = por %p153, %p154
    %p156 = scmp.ne.s32.totalorder %s148, %s150
    %p157 = scmp.eq.s32.totalorder %s21, 1
    %p158 = por %p156, %p157
    %p159 = scmp.ne.s32.totalorder %s150, %s151
    %p160 = scmp.eq.s32.totalorder %s21, 0
    %p161 = por %p159, %p160
    %p162 = scmp.ne.s32.totalorder %s150, %s151
    %p163 = scmp.eq.s32.totalorder %s22, 1
    %p164 = por %p162, %p163
    %p166 = scmp.ne.s32.totalorder %s151, %s165
    %p167 = scmp.eq.s32.totalorder %s22, 0
    %p168 = por %p166, %p167
    %s170 = sadd.s32 %s169, 1
    %p173 = scmp.eq.s32.totalorder %s16, 1
    %p174 = scmp.ne.s32.totalorder %s169, %s171
    %p175 = scmp.eq.s32.totalorder %s16, 0
    %p176 = por %p174, %p175
    %p177 = scmp.ne.s32.totalorder %s169, %s171
    %p178 = scmp.eq.s32.totalorder %s21, 1
    %p179 = por %p177, %p178
    %p180 = scmp.ne.s32.totalorder %s171, %s172
    %p181 = scmp.eq.s32.totalorder %s21, 0
    %p182 = por %p180, %p181
    %p183 = scmp.ne.s32.totalorder %s171, %s172
    %p184 = scmp.eq.s32.totalorder %s22, 1
    %p185 = por %p183, %p184
    %p187 = scmp.ne.s32.totalorder %s172, %s186
    %p188 = scmp.eq.s32.totalorder %s22, 0
    %p189 = por %p187, %p188
    %s191 = sadd.s32 %s190, 1
    %p194 = scmp.eq.s32.totalorder %s16, 1
    %p195 = scmp.ne.s32.totalorder %s190, %s192
    %p196 = scmp.eq.s32.totalorder %s16, 0
    %p197 = por %p195, %p196
    %p198 = scmp.ne.s32.totalorder %s190, %s192
    %p199 = scmp.eq.s32.totalorder %s21, 1
    %p200 = por %p198, %p199
    %p201 = scmp.ne.s32.totalorder %s192, %s193
    %p202 = scmp.eq.s32.totalorder %s21, 0
    %p203 = por %p201, %p202
    %p204 = scmp.ne.s32.totalorder %s192, %s193
    %p205 = scmp.eq.s32.totalorder %s22, 1
    %p206 = por %p204, %p205
    %p208 = scmp.ne.s32.totalorder %s193, %s207
    %p209 = scmp.eq.s32.totalorder %s22, 0
    %p210 = por %p208, %p209
    %s211 = ssub.s32 %s16, %s23
    %p212 = scmp.eq.s32.totalorder %s211, 0
    %s214 = sadd.s32 %s213, 1
    %s215 = scalar_select %p212, %s213, %s214
    %p218 = pneg %p212
    %p219 = scmp.eq.s32.totalorder %s16, 1
    %p220 = por %p218, %p219
    %p221 = scmp.ne.s32.totalorder %s213, %s216
    %p222 = scmp.eq.s32.totalorder %s16, 0
    %p223 = por %p221, %p222
    %p224 = scmp.ne.s32.totalorder %s213, %s216
    %p225 = scmp.eq.s32.totalorder %s21, 1
    %p226 = por %p224, %p225
    %p227 = scmp.ne.s32.totalorder %s216, %s217
    %p228 = scmp.eq.s32.totalorder %s21, 0
    %p229 = por %p227, %p228
    %p230 = scmp.ne.s32.totalorder %s216, %s217
    %p231 = scmp.eq.s32.totalorder %s22, 1
    %p232 = por %p230, %p231
    %p234 = scmp.ne.s32.totalorder %s217, %s233
    %p235 = scmp.eq.s32.totalorder %s22, 0
    %p236 = por %p234, %p235
    %s237 = ssub.s32 %s16, %s23
    %p238 = scmp.eq.s32.totalorder %s237, 0
    %s240 = sadd.s32 %s239, 1
    %s241 = scalar_select %p238, %s239, %s240
    %p244 = pneg %p238
    %p245 = scmp.eq.s32.totalorder %s16, 1
    %p246 = por %p244, %p245
    %p247 = scmp.ne.s32.totalorder %s239, %s242
    %p248 = scmp.eq.s32.totalorder %s16, 0
    %p249 = por %p247, %p248
    %p250 = scmp.ne.s32.totalorder %s239, %s242
    %p251 = scmp.eq.s32.totalorder %s21, 1
    %p252 = por %p250, %p251
    %p253 = scmp.ne.s32.totalorder %s242, %s243
    %p254 = scmp.eq.s32.totalorder %s21, 0
    %p255 = por %p253, %p254
    %p256 = scmp.ne.s32.totalorder %s242, %s243
    %p257 = scmp.eq.s32.totalorder %s22, 1
    %p258 = por %p256, %p257
    %p260 = scmp.ne.s32.totalorder %s243, %s259
    %p261 = scmp.eq.s32.totalorder %s22, 0
    %p262 = por %p260, %p261
    %p263 = scmp.le.s32.totalorder 1, %s16
    %p264 = scmp.lt.s32.totalorder %s16, 3
    %p265 = pnand %p263, %p264
    %p266 = pneg %p265
    // Predicated region
    $region9: #{_consistency_apply_pair.1} parent=5 // pred_check
      _
    $region10: #{_consistency_apply_pair.1} parent=5 // pred_check_branch
      %268 = sbr.rel (%p265) target = $region12
    $region11: #{_consistency_apply_pair.1} parent=5 // pred_region
      %s269 = ssub.s32 %s16, 1
      // Predicated region
      $region13: #{_consistency_apply_pair.1} parent=11 // pred_check
        %p270 = pneg %p119
      $region14: #{_consistency_apply_pair.1} parent=11 // pred_check_branch
        %272 = sbr.rel (%p270) target = $region16
      $region15: #{_consistency_apply_pair.1} parent=11 // pred_region
        _
      $region16: #{_consistency_apply_pair.1} parent=11 // pred_fallthru
        _
      // Predicated region
      $region17: #{_consistency_apply_pair.1} parent=11 // pred_check
        %p273 = pneg %p140
      $region18: #{_consistency_apply_pair.1} parent=11 // pred_check_branch
        %275 = sbr.rel (%p273) target = $region20
      $region19: #{_consistency_apply_pair.1} parent=11 // pred_region
        _
      $region20: #{_consistency_apply_pair.1} parent=11 // pred_fallthru
        _
      // Predicated region
      $region21: #{_consistency_apply_pair.1} parent=11 // pred_check
        %p276 = pneg %p161
      $region22: #{_consistency_apply_pair.1} parent=11 // pred_check_branch
        %278 = sbr.rel (%p276) target = $region24
      $region23: #{_consistency_apply_pair.1} parent=11 // pred_region
        _
      $region24: #{_consistency_apply_pair.1} parent=11 // pred_fallthru
        _
      // Predicated region
      $region25: #{_consistency_apply_pair.1} parent=11 // pred_check
        %p279 = pneg %p182
      $region26: #{_consistency_apply_pair.1} parent=11 // pred_check_branch
        %281 = sbr.rel (%p279) target = $region28
      $region27: #{_consistency_apply_pair.1} parent=11 // pred_region
        _
      $region28: #{_consistency_apply_pair.1} parent=11 // pred_fallthru
        _
      // Predicated region
      $region29: #{_consistency_apply_pair.1} parent=11 // pred_check
        %p282 = pneg %p203
      $region30: #{_consistency_apply_pair.1} parent=11 // pred_check_branch
        %284 = sbr.rel (%p282) target = $region32
      $region31: #{_consistency_apply_pair.1} parent=11 // pred_region
        _
      $region32: #{_consistency_apply_pair.1} parent=11 // pred_fallthru
        _
    $region12: #{_consistency_apply_pair.1} parent=5 // pred_fallthru
      _
    %p285 = scmp.lt.s32.totalorder %s16, 2
    // Predicated region
    $region33: #{_consistency_apply_pair.1} parent=5 // pred_check
      %p286 = pneg %p285
    $region34: #{_consistency_apply_pair.1} parent=5 // pred_check_branch
      %288 = sbr.rel (%p286) target = $region36
    $region35: #{_consistency_apply_pair.1} parent=5 // pred_region
      // Predicated region
      $region37: #{_consistency_apply_pair.1} parent=35 // pred_check
        %p289 = pneg %p36
      $region38: #{_consistency_apply_pair.1} parent=35 // pred_check_branch
        %291 = sbr.rel (%p289) target = $region40
      $region39: #{_consistency_apply_pair.1} parent=35 // pred_region
        %p292 = scmp.lt.s32.totalorder %s16, 1
        %s293 = scalar_select %p292, %s16, 1
        %s294 = smul.addr %s293, 4
        %s295 = smul.addr %s294, 4
        %s296 = scalar_lea.vmem %s0, %s295
      $region40: #{_consistency_apply_pair.1} parent=35 // pred_fallthru
        _
      // Predicated region
      $region41: #{_consistency_apply_pair.1} parent=35 // pred_check
        %p297 = pneg %p62
      $region42: #{_consistency_apply_pair.1} parent=35 // pred_check_branch
        %299 = sbr.rel (%p297) target = $region44
      $region43: #{_consistency_apply_pair.1} parent=35 // pred_region
        %p300 = scmp.lt.s32.totalorder %s16, 1
        %s301 = scalar_select %p300, %s16, 1
        %s302 = smul.addr %s301, 4
        %s303 = smul.addr %s302, 4
        %s304 = scalar_lea.vmem %s1, %s303
      $region44: #{_consistency_apply_pair.1} parent=35 // pred_fallthru
        _
      // Predicated region
      $region45: #{_consistency_apply_pair.1} parent=35 // pred_check
        %p305 = pneg %p92
      $region46: #{_consistency_apply_pair.1} parent=35 // pred_check_branch
        %307 = sbr.rel (%p305) target = $region48
      $region47: #{_consistency_apply_pair.1} parent=35 // pred_region
        %p308 = scmp.lt.s32.totalorder %s16, 0
        %s309 = scalar_select %p308, %s16, 0
        %p310 = scmp.lt.s32.totalorder %s309, 0
        %s311 = scalar_select %p310, %s309, 0
        %s312 = smul.addr %s311, 3
        %s313 = smul.addr %s312, 4
        %s314 = scalar_lea.vmem %s2, %s313
        %p315 = scmp.lt.s32.totalorder %s16, 0
        %s316 = scalar_select %p315, %s16, 0
      $region48: #{_consistency_apply_pair.1} parent=35 // pred_fallthru
        _
    $region36: #{_consistency_apply_pair.1} parent=5 // pred_fallthru
      _
    %p317 = scmp.le.s32.totalorder 1, %s16
    %p318 = scmp.lt.s32.totalorder %s16, 3
    %p319 = pnand %p317, %p318
    %p320 = pneg %p319
    // Predicated region
    $region49: #{_consistency_apply_pair.1} parent=5 // pred_check
      _
    $region50: #{_consistency_apply_pair.1} parent=5 // pred_check_branch
      %322 = sbr.rel (%p319) target = $region52
    $region51: #{_consistency_apply_pair.1} parent=5 // pred_region
      %s323 = ssub.s32 %s16, 1
      %p324 = scmp.lt.s32.totalorder %s21, 1
      %s325 = scalar_select %p324, %s21, 1
      %s326 = smul.addr %s325, 4
      %s327 = smul.addr %s326, 4
      %s328 = scalar_lea.vmem %s0, %s327
      %p329 = pneg %p42
      %p330 = pneg %p39
      %p331 = scmp.lt.s32.totalorder %s21, 1
      %s332 = scalar_select %p331, %s21, 1
      %s333 = smul.addr %s332, 4
      %s334 = smul.addr %s333, 4
      %s335 = scalar_lea.vmem %s1, %s334
      %p336 = pneg %p68
      %p337 = pneg %p65
      %p338 = scmp.lt.s32.totalorder %s21, 0
      %s339 = scalar_select %p338, %s21, 0
      %p340 = scmp.lt.s32.totalorder %s339, 0
      %s341 = scalar_select %p340, %s339, 0
      %s342 = smul.addr %s341, 3
      %s343 = smul.addr %s342, 4
      %s344 = scalar_lea.vmem %s2, %s343
      %p345 = pneg %p98
      %p346 = pneg %p95
      %p347 = pneg %p119
      %p348 = pneg %p116
      %p349 = pneg %p140
      %p350 = pneg %p137
      %p351 = pneg %p161
      %p352 = pneg %p158
      %p353 = pneg %p182
      %p354 = pneg %p179
      %p355 = pneg %p203
      %p356 = pneg %p200
      %p357 = pneg %p229
      %p358 = pneg %p226
      %p359 = scmp.lt.s32.totalorder %s21, 1
      %s360 = scalar_select %p359, %s21, 1
      %s361 = smul.addr %s360, 12
      %s362 = smul.addr %s361, 8
      %s363 = scalar_lea.vmem %s8, %s362
      %p364 = pneg %p255
      %p365 = pneg %p252
      %p366 = scmp.lt.s32.totalorder %s21, 1
      %s367 = scalar_select %p366, %s21, 1
      %s368 = smul.addr %s367, 2
      %s369 = scalar_lea.vmem %s9, %s368
      %p370 = scmp.lt.s32.totalorder %s21, 1
      %s371 = scalar_select %p370, %s21, 1
      %s372 = smul.addr %s371, 4
      %s373 = smul.addr %s372, 4
      %s374 = scalar_lea.vmem %s0, %s373
      %p375 = scmp.lt.s32.totalorder %s21, 1
      %s376 = scalar_select %p375, %s21, 1
      %s377 = smul.addr %s376, 4
      %s378 = smul.addr %s377, 4
      %s379 = scalar_lea.vmem %s1, %s378
      %p380 = scmp.lt.s32.totalorder %s21, 0
      %s381 = scalar_select %p380, %s21, 0
      %p382 = scmp.lt.s32.totalorder %s381, 0
      %s383 = scalar_select %p382, %s381, 0
      %s384 = smul.addr %s383, 3
      %s385 = smul.addr %s384, 4
      %s386 = scalar_lea.vmem %s2, %s385
      %p387 = scmp.lt.s32.totalorder %s21, 0
      %s388 = scalar_select %p387, %s21, 0
      %p389 = scmp.lt.s32.totalorder %s21, 1
      %s390 = scalar_select %p389, %s21, 1
      %s391 = smul.addr %s390, 12
      %s392 = smul.addr %s391, 8
      %s393 = scalar_lea.vmem %s8, %s392
      %p394 = scmp.lt.s32.totalorder %s21, 1
      %s395 = scalar_select %p394, %s21, 1
      %s396 = smul.addr %s395, 2
      %s397 = scalar_lea.vmem %s9, %s396
      %v399 = vld [vmem:[%s374] sm:$0xff]
      %v400 = vld [vmem:[%s374 + $0x8] sm:$0xff]
      %401 = vst [vmem:[#allocation2] sm:$0xff] %v399
      %402 = vst [vmem:[#allocation2 + $0x8] sm:$0xf] %v400
      %405 = vrot.lane.b32.xlu0 %v399, 127
      %v406 = vpop.permute.xlu0 %405
      %407 = vrot.lane.b32.xlu0 %v400, 127
      %v408 = vpop.permute.xlu0 %407
      %v409 = vrot.slane %v406, 4
      %v410 = vrot.slane %v408, 4
      %vm411 = vcmask 1043456
      %v412 = vsel %vm411, %v409, %v410
      %vm413 = vcmask 1039360
      %v414 = vsel %vm413, %v406, %v412
      %v415 = vsel %vm413, %v408, %v410
      %418 = vst [vmem:[#allocation2 + $0x18] sm:$0xff] %v414
      %419 = vst [vmem:[#allocation2 + $0x20] sm:$0xf] %v415
      %420 = vrot.lane.b32.xlu0 %v399, 126
      %v421 = vpop.permute.xlu0 %420
      %422 = vrot.lane.b32.xlu0 %v400, 126
      %v423 = vpop.permute.xlu0 %422
      %v424 = vrot.slane %v421, 4
      %v425 = vrot.slane %v423, 4
      %v426 = vsel %vm411, %v424, %v425
      %vm427 = vcmask 1031168
      %v428 = vsel %vm427, %v421, %v426
      %v429 = vsel %vm427, %v423, %v425
      %432 = vst [vmem:[#allocation2 + $0x30] sm:$0xff] %v428
      %433 = vst [vmem:[#allocation2 + $0x38] sm:$0xf] %v429
      %434 = vrot.lane.b32.xlu0 %v399, 110
      %v435 = vpop.permute.xlu0 %434
      %436 = vrot.lane.b32.xlu0 %v400, 110
      %v437 = vpop.permute.xlu0 %436
      %v438 = vrot.slane %v435, 4
      %v439 = vrot.slane %v437, 4
      %v440 = vsel %vm411, %v438, %v439
      %vm441 = vcmask 900096
      %v442 = vsel %vm441, %v435, %v440
      %v443 = vsel %vm441, %v437, %v439
      %446 = vst [vmem:[#allocation2 + $0x48] sm:$0xff] %v442
      %447 = vst [vmem:[#allocation2 + $0x50] sm:$0xf] %v443
      %448 = vrot.lane.b32.xlu0 %v399, 109
      %v449 = vpop.permute.xlu0 %448
      %450 = vrot.lane.b32.xlu0 %v400, 109
      %v451 = vpop.permute.xlu0 %450
      %v452 = vrot.slane %v449, 4
      %v453 = vrot.slane %v451, 4
      %v454 = vsel %vm411, %v452, %v453
      %vm455 = vcmask 891904
      %v456 = vsel %vm455, %v449, %v454
      %v457 = vsel %vm455, %v451, %v453
      %460 = vst [vmem:[#allocation2 + $0x60] sm:$0xff] %v456
      %461 = vst [vmem:[#allocation2 + $0x68] sm:$0xf] %v457
      %462 = vrot.lane.b32.xlu0 %v399, 108
      %v463 = vpop.permute.xlu0 %462
      %464 = vrot.lane.b32.xlu0 %v400, 108
      %v465 = vpop.permute.xlu0 %464
      %v466 = vrot.slane %v463, 4
      %v467 = vrot.slane %v465, 4
      %v468 = vsel %vm411, %v466, %v467
      %vm469 = vcmask 883712
      %v470 = vsel %vm469, %v463, %v468
      %v471 = vsel %vm469, %v465, %v467
      %474 = vst [vmem:[#allocation2 + $0x78] sm:$0xff] %v470
      %475 = vst [vmem:[#allocation2 + $0x80] sm:$0xf] %v471
      %476 = vrot.lane.b32.xlu0 %v399, 92
      %v477 = vpop.permute.xlu0 %476
      %478 = vrot.lane.b32.xlu0 %v400, 92
      %v479 = vpop.permute.xlu0 %478
      %v480 = vrot.slane %v477, 4
      %v481 = vrot.slane %v479, 4
      %v482 = vsel %vm411, %v480, %v481
      %vm483 = vcmask 752640
      %v484 = vsel %vm483, %v477, %v482
      %v485 = vsel %vm483, %v479, %v481
      %488 = vst [vmem:[#allocation2 + $0x90] sm:$0xff] %v484
      %489 = vst [vmem:[#allocation2 + $0x98] sm:$0xf] %v485
      %490 = vrot.lane.b32.xlu0 %v399, 91
      %v491 = vpop.permute.xlu0 %490
      %492 = vrot.lane.b32.xlu0 %v400, 91
      %v493 = vpop.permute.xlu0 %492
      %v494 = vrot.slane %v491, 4
      %v495 = vrot.slane %v493, 4
      %v496 = vsel %vm411, %v494, %v495
      %vm497 = vcmask 744448
      %v498 = vsel %vm497, %v491, %v496
      %v499 = vsel %vm497, %v493, %v495
      %502 = vst [vmem:[#allocation2 + $0xa8] sm:$0xff] %v498
      %503 = vst [vmem:[#allocation2 + $0xb0] sm:$0xf] %v499
      %504 = vrot.lane.b32.xlu0 %v399, 90
      %v505 = vpop.permute.xlu0 %504
      %506 = vrot.lane.b32.xlu0 %v400, 90
      %v507 = vpop.permute.xlu0 %506
      %v508 = vrot.slane %v505, 4
      %v509 = vrot.slane %v507, 4
      %v510 = vsel %vm411, %v508, %v509
      %vm511 = vcmask 736256
      %v512 = vsel %vm511, %v505, %v510
      %v513 = vsel %vm511, %v507, %v509
      %516 = vst [vmem:[#allocation2 + $0xc0] sm:$0xff] %v512
      %517 = vst [vmem:[#allocation2 + $0xc8] sm:$0xf] %v513
      %v518 = vld [vmem:[%s379] sm:$0xff]
      %v519 = vld [vmem:[%s379 + $0x8] sm:$0xff]
      %520 = vst [vmem:[#allocation2 + $0xc] sm:$0xff] %v518
      %521 = vst [vmem:[#allocation2 + $0x14] sm:$0xf] %v519
      %524 = vrot.lane.b32.xlu0 %v518, 127
      %v525 = vpop.permute.xlu0 %524
      %526 = vrot.lane.b32.xlu0 %v519, 127
      %v527 = vpop.permute.xlu0 %526
      %v528 = vrot.slane %v525, 4
      %v529 = vrot.slane %v527, 4
      %v530 = vsel %vm411, %v528, %v529
      %v531 = vsel %vm413, %v525, %v530
      %v532 = vsel %vm413, %v527, %v529
      %535 = vst [vmem:[#allocation2 + $0x24] sm:$0xff] %v531
      %536 = vst [vmem:[#allocation2 + $0x2c] sm:$0xf] %v532
      %537 = vrot.lane.b32.xlu0 %v518, 126
      %v538 = vpop.permute.xlu0 %537
      %539 = vrot.lane.b32.xlu0 %v519, 126
      %v540 = vpop.permute.xlu0 %539
      %v541 = vrot.slane %v538, 4
      %v542 = vrot.slane %v540, 4
      %v543 = vsel %vm411, %v541, %v542
      %v544 = vsel %vm427, %v538, %v543
      %v545 = vsel %vm427, %v540, %v542
      %548 = vst [vmem:[#allocation2 + $0x3c] sm:$0xff] %v544
      %549 = vst [vmem:[#allocation2 + $0x44] sm:$0xf] %v545
      %550 = vrot.lane.b32.xlu0 %v518, 110
      %v551 = vpop.permute.xlu0 %550
      %552 = vrot.lane.b32.xlu0 %v519, 110
      %v553 = vpop.permute.xlu0 %552
      %v554 = vrot.slane %v551, 4
      %v555 = vrot.slane %v553, 4
      %v556 = vsel %vm411, %v554, %v555
      %v557 = vsel %vm441, %v551, %v556
      %v558 = vsel %vm441, %v553, %v555
      %561 = vst [vmem:[#allocation2 + $0x54] sm:$0xff] %v557
      %562 = vst [vmem:[#allocation2 + $0x5c] sm:$0xf] %v558
      %563 = vrot.lane.b32.xlu0 %v518, 109
      %v564 = vpop.permute.xlu0 %563
      %565 = vrot.lane.b32.xlu0 %v519, 109
      %v566 = vpop.permute.xlu0 %565
      %v567 = vrot.slane %v564, 4
      %v568 = vrot.slane %v566, 4
      %v569 = vsel %vm411, %v567, %v568
      %v570 = vsel %vm455, %v564, %v569
      %v571 = vsel %vm455, %v566, %v568
      %574 = vst [vmem:[#allocation2 + $0x6c] sm:$0xff] %v570
      %575 = vst [vmem:[#allocation2 + $0x74] sm:$0xf] %v571
      %576 = vrot.lane.b32.xlu0 %v518, 108
      %v577 = vpop.permute.xlu0 %576
      %578 = vrot.lane.b32.xlu0 %v519, 108
      %v579 = vpop.permute.xlu0 %578
      %v580 = vrot.slane %v577, 4
      %v581 = vrot.slane %v579, 4
      %v582 = vsel %vm411, %v580, %v581
      %v583 = vsel %vm469, %v577, %v582
      %v584 = vsel %vm469, %v579, %v581
      %587 = vst [vmem:[#allocation2 + $0x84] sm:$0xff] %v583
      %588 = vst [vmem:[#allocation2 + $0x8c] sm:$0xf] %v584
      %589 = vrot.lane.b32.xlu0 %v518, 92
      %v590 = vpop.permute.xlu0 %589
      %591 = vrot.lane.b32.xlu0 %v519, 92
      %v592 = vpop.permute.xlu0 %591
      %v593 = vrot.slane %v590, 4
      %v594 = vrot.slane %v592, 4
      %v595 = vsel %vm411, %v593, %v594
      %v596 = vsel %vm483, %v590, %v595
      %v597 = vsel %vm483, %v592, %v594
      %600 = vst [vmem:[#allocation2 + $0x9c] sm:$0xff] %v596
      %601 = vst [vmem:[#allocation2 + $0xa4] sm:$0xf] %v597
      %602 = vrot.lane.b32.xlu0 %v518, 91
      %v603 = vpop.permute.xlu0 %602
      %604 = vrot.lane.b32.xlu0 %v519, 91
      %v605 = vpop.permute.xlu0 %604
      %v606 = vrot.slane %v603, 4
      %v607 = vrot.slane %v605, 4
      %v608 = vsel %vm411, %v606, %v607
      %v609 = vsel %vm497, %v603, %v608
      %v610 = vsel %vm497, %v605, %v607
      %613 = vst [vmem:[#allocation2 + $0xb4] sm:$0xff] %v609
      %614 = vst [vmem:[#allocation2 + $0xbc] sm:$0xf] %v610
      %615 = vrot.lane.b32.xlu0 %v518, 90
      %v616 = vpop.permute.xlu0 %615
      %617 = vrot.lane.b32.xlu0 %v519, 90
      %v618 = vpop.permute.xlu0 %617
      %v619 = vrot.slane %v616, 4
      %v620 = vrot.slane %v618, 4
      %v621 = vsel %vm411, %v619, %v620
      %v622 = vsel %vm511, %v616, %v621
      %v623 = vsel %vm511, %v618, %v620
      %626 = vst [vmem:[#allocation2 + $0xcc] sm:$0xff] %v622
      %627 = vst [vmem:[#allocation2 + $0xd4] sm:$0xf] %v623
      %v628 = vld [vmem:[#allocation2] sm:$0xff]
      %v629 = vld [vmem:[#allocation2 + $0x8] sm:$0xff]
      %v630 = vld [vmem:[#allocation2 + $0x10] sm:$0xff]
      %v631 = vld [vmem:[#allocation2 + $0x18] sm:$0xff]
      %v632 = vld [vmem:[#allocation2 + $0x20] sm:$0xff]
      %v633 = vld [vmem:[#allocation2 + $0x28] sm:$0xff]
      %v634 = vld [vmem:[#allocation2 + $0x30] sm:$0xff]
      %v635 = vld [vmem:[#allocation2 + $0x38] sm:$0xff]
      %v636 = vld [vmem:[#allocation2 + $0x40] sm:$0xff]
      %v637 = vld [vmem:[#allocation2 + $0x48] sm:$0xff]
      %v638 = vld [vmem:[#allocation2 + $0x50] sm:$0xff]
      %v639 = vld [vmem:[#allocation2 + $0x58] sm:$0xff]
      %v640 = vld [vmem:[#allocation2 + $0x60] sm:$0xff]
      %v641 = vld [vmem:[#allocation2 + $0x68] sm:$0xff]
      %v642 = vld [vmem:[#allocation2 + $0x70] sm:$0xff]
      %v643 = vld [vmem:[#allocation2 + $0x78] sm:$0xff]
      %v644 = vld [vmem:[#allocation2 + $0x80] sm:$0xff]
      %v645 = vld [vmem:[#allocation2 + $0x88] sm:$0xff]
      %v646 = vld [vmem:[#allocation2 + $0x90] sm:$0xff]
      %v647 = vld [vmem:[#allocation2 + $0x98] sm:$0xff]
      %v648 = vld [vmem:[#allocation2 + $0xa0] sm:$0xff]
      %v649 = vld [vmem:[#allocation2 + $0xa8] sm:$0xff]
      %v650 = vld [vmem:[#allocation2 + $0xb0] sm:$0xff]
      %v651 = vld [vmem:[#allocation2 + $0xb8] sm:$0xff]
      %v652 = vld [vmem:[#allocation2 + $0xc0] sm:$0xff]
      %v653 = vld [vmem:[#allocation2 + $0xc8] sm:$0xff]
      %v654 = vld [vmem:[#allocation2 + $0xd0] sm:$0xff]
      %v655 = vld [vmem:[%s4] sm:$0xf]
      %v656 = vld [vmem:[%s4 + $0x4] sm:$0xf]
      %v657 = vld [vmem:[%s4 + $0x8] sm:$0xf]
      %v658 = vld [vmem:[%s4 + $0xc] sm:$0xf]
      %v659 = vld [vmem:[%s5] sm:$0xff]
      %v660 = vld [vmem:[%s5 + $0x8] sm:$0xff]
      %v661 = vld [vmem:[%s5 + $0x10] sm:$0xff]
      %v662 = vld [vmem:[%s5 + $0x18] sm:$0xff]
      %v663 = vld [vmem:[%s6] sm:$0x3]
      %v664 = vld [vmem:[%s7] sm:$0x7]
      %666 = vset.pattern.permute.xlu0 0
      %667 = vperm.xlu0 %666, %v659
      %v668 = vpop.permute.xlu0 %667
      %671 = vset.pattern.permute.xlu0 0
      %672 = vperm.xlu0 %671, %v660
      %v673 = vpop.permute.xlu0 %672
      %676 = vset.pattern.permute.xlu0 0
      %677 = vperm.xlu0 %676, %v661
      %v678 = vpop.permute.xlu0 %677
      %681 = vset.pattern.permute.xlu0 0
      %682 = vperm.xlu0 %681, %v662
      %v683 = vpop.permute.xlu0 %682
      %v689 = vunpack.c.l.b16 %v655
      %v690 = vunpack.c.l.b16 %v656
      %v691 = vunpack.c.l.b16 %v657
      %v692 = vunpack.c.l.b16 %v658
      %v693 = vpack.c.b16 %v690, %v689
      %v694 = vpack.c.b16 %v692, %v691
      %v722 = vunpack.c.l.b16 %v628
      %v723 = vunpack.c.h.b16 %v628
      %v724 = vunpack.c.l.b16 %v629
      %v725 = vunpack.c.h.b16 %v629
      %v726 = vunpack.c.l.b16 %v630
      %v727 = vunpack.c.h.b16 %v630
      %v728 = vunpack.c.l.b16 %v631
      %v729 = vunpack.c.h.b16 %v631
      %v730 = vunpack.c.l.b16 %v632
      %v731 = vunpack.c.h.b16 %v632
      %v732 = vunpack.c.l.b16 %v633
      %v733 = vunpack.c.h.b16 %v633
      %v734 = vunpack.c.l.b16 %v634
      %v735 = vunpack.c.h.b16 %v634
      %v736 = vunpack.c.l.b16 %v635
      %v737 = vunpack.c.h.b16 %v635
      %v738 = vunpack.c.l.b16 %v636
      %v739 = vunpack.c.h.b16 %v636
      %v740 = vunpack.c.l.b16 %v637
      %v741 = vunpack.c.h.b16 %v637
      %v742 = vunpack.c.l.b16 %v638
      %v743 = vunpack.c.h.b16 %v638
      %v744 = vunpack.c.l.b16 %v639
      %v745 = vunpack.c.h.b16 %v639
      %v746 = vunpack.c.l.b16 %v640
      %v747 = vunpack.c.h.b16 %v640
      %v748 = vunpack.c.l.b16 %v641
      %v749 = vunpack.c.h.b16 %v641
      %v750 = vunpack.c.l.b16 %v642
      %v751 = vunpack.c.h.b16 %v642
      %v752 = vunpack.c.l.b16 %v643
      %v753 = vunpack.c.h.b16 %v643
      %v754 = vunpack.c.l.b16 %v644
      %v755 = vunpack.c.h.b16 %v644
      %v756 = vunpack.c.l.b16 %v645
      %v757 = vunpack.c.h.b16 %v645
      %v758 = vunpack.c.l.b16 %v646
      %v759 = vunpack.c.h.b16 %v646
      %v760 = vunpack.c.l.b16 %v647
      %v761 = vunpack.c.h.b16 %v647
      %v762 = vunpack.c.l.b16 %v648
      %v763 = vunpack.c.h.b16 %v648
      %v764 = vunpack.c.l.b16 %v649
      %v765 = vunpack.c.h.b16 %v649
      %v766 = vunpack.c.l.b16 %v650
      %v767 = vunpack.c.h.b16 %v650
      %v768 = vunpack.c.l.b16 %v651
      %v769 = vunpack.c.h.b16 %v651
      %v770 = vunpack.c.l.b16 %v652
      %v771 = vunpack.c.h.b16 %v652
      %v772 = vunpack.c.l.b16 %v653
      %v773 = vunpack.c.h.b16 %v653
      %v774 = vunpack.c.l.b16 %v654
      %v775 = vunpack.c.h.b16 %v654
      %v776 = vpack.c.b16 %v728, %v722
      %v777 = vpack.c.b16 %v729, %v723
      %v778 = vpack.c.b16 %v730, %v724
      %v779 = vpack.c.b16 %v731, %v725
      %v780 = vpack.c.b16 %v732, %v726
      %v781 = vpack.c.b16 %v733, %v727
      %v782 = vpack.c.b16 %v740, %v734
      %v783 = vpack.c.b16 %v741, %v735
      %v784 = vpack.c.b16 %v742, %v736
      %v785 = vpack.c.b16 %v743, %v737
      %v786 = vpack.c.b16 %v744, %v738
      %v787 = vpack.c.b16 %v745, %v739
      %v788 = vpack.c.b16 %v752, %v746
      %v789 = vpack.c.b16 %v753, %v747
      %v790 = vpack.c.b16 %v754, %v748
      %v791 = vpack.c.b16 %v755, %v749
      %v792 = vpack.c.b16 %v756, %v750
      %v793 = vpack.c.b16 %v757, %v751
      %v794 = vpack.c.b16 %v764, %v758
      %v795 = vpack.c.b16 %v765, %v759
      %v796 = vpack.c.b16 %v766, %v760
      %v797 = vpack.c.b16 %v767, %v761
      %v798 = vpack.c.b16 %v768, %v762
      %v799 = vpack.c.b16 %v769, %v763
      %v800 = vpack.c.b16 %v770, %v770
      %v801 = vpack.c.b16 %v771, %v771
      %v802 = vpack.c.b16 %v772, %v772
      %v803 = vpack.c.b16 %v773, %v773
      %v804 = vpack.c.b16 %v774, %v774
      %v805 = vpack.c.b16 %v775, %v775
      %vm830 = vcmask 588800
      %v832 = vsel %vm830, %v693, 0
      %v835 = vsel %vm830, %v694, 0
      %vm837 = vcmask 1043456
      %v839 = vsel %vm837, %v800, 0
      %v842 = vsel %vm837, %v801, 0
      %v845 = vsel %vm837, %v802, 0
      %v848 = vsel %vm837, %v803, 0
      %v851 = vsel %vm837, %v804, 0
      %v854 = vsel %vm837, %v805, 0
      %856 = vmatpush.bf16.msra.mxu0 0
      %857 = vmatpush.bf16.msra.mxu0 0
      %858 = vmatpush.bf16.msra.mxu0 0
      %859 = vmatpush.bf16.msra.mxu0 %v839
      %860 = vmatpush.bf16.msra.mxu0 %v794
      %861 = vmatpush.bf16.msra.mxu0 %v788
      %862 = vmatpush.bf16.msra.mxu0 %v782
      %863 = vmatpush.bf16.msra.mxu0 %v776
      %864 = vmatmul.bf16.gmra.mxu0 %v832
      %v865 = vpop.f32.mrf.mxu0
      %v866 = vadd.f32 %v668, %v865
      %v867 = vpop.f32.mrf.mxu0
      %v868 = vadd.f32 %v673, %v867
      %869 = vmatmul.bf16.gmra.mxu0 %v835
      %v870 = vpop.f32.mrf.mxu0
      %v871 = vadd.f32 %v678, %v870
      %v872 = vpop.f32.mrf.mxu0
      %v873 = vadd.f32 %v683, %v872
      %874 = vdwg.mxu0
      %875 = vmatpush.bf16.msra.mxu0 0
      %876 = vmatpush.bf16.msra.mxu0 0
      %877 = vmatpush.bf16.msra.mxu0 0
      %878 = vmatpush.bf16.msra.mxu0 %v842
      %879 = vmatpush.bf16.msra.mxu0 %v795
      %880 = vmatpush.bf16.msra.mxu0 %v789
      %881 = vmatpush.bf16.msra.mxu0 %v783
      %882 = vmatpush.bf16.msra.mxu0 %v777
      %883 = vmatmul.bf16.gmra.mxu0 %v832
      %v884 = vpop.f32.mrf.mxu0
      %v885 = vadd.f32 %v668, %v884
      %v886 = vpop.f32.mrf.mxu0
      %v887 = vadd.f32 %v673, %v886
      %888 = vmatmul.bf16.gmra.mxu0 %v835
      %v889 = vpop.f32.mrf.mxu0
      %v890 = vadd.f32 %v678, %v889
      %v891 = vpop.f32.mrf.mxu0
      %v892 = vadd.f32 %v683, %v891
      %893 = vdwg.mxu0
      %894 = vmatpush.bf16.msra.mxu0 0
      %895 = vmatpush.bf16.msra.mxu0 0
      %896 = vmatpush.bf16.msra.mxu0 0
      %897 = vmatpush.bf16.msra.mxu0 %v845
      %898 = vmatpush.bf16.msra.mxu0 %v796
      %899 = vmatpush.bf16.msra.mxu0 %v790
      %900 = vmatpush.bf16.msra.mxu0 %v784
      %901 = vmatpush.bf16.msra.mxu0 %v778
      %902 = vmatmul.bf16.gmra.mxu0 %v832
      %v903 = vpop.f32.mrf.mxu0
      %v904 = vadd.f32 %v668, %v903
      %v905 = vpop.f32.mrf.mxu0
      %v906 = vadd.f32 %v673, %v905
      %907 = vmatmul.bf16.gmra.mxu0 %v835
      %v908 = vpop.f32.mrf.mxu0
      %v909 = vadd.f32 %v678, %v908
      %v910 = vpop.f32.mrf.mxu0
      %v911 = vadd.f32 %v683, %v910
      %912 = vdwg.mxu0
      %913 = vmatpush.bf16.msra.mxu0 0
      %914 = vmatpush.bf16.msra.mxu0 0
      %915 = vmatpush.bf16.msra.mxu0 0
      %916 = vmatpush.bf16.msra.mxu0 %v848
      %917 = vmatpush.bf16.msra.mxu0 %v797
      %918 = vmatpush.bf16.msra.mxu0 %v791
      %919 = vmatpush.bf16.msra.mxu0 %v785
      %920 = vmatpush.bf16.msra.mxu0 %v779
      %921 = vmatmul.bf16.gmra.mxu0 %v832
      %v922 = vpop.f32.mrf.mxu0
      %v923 = vadd.f32 %v668, %v922
      %v924 = vpop.f32.mrf.mxu0
      %v925 = vadd.f32 %v673, %v924
      %926 = vmatmul.bf16.gmra.mxu0 %v835
      %v927 = vpop.f32.mrf.mxu0
      %v928 = vadd.f32 %v678, %v927
      %v929 = vpop.f32.mrf.mxu0
      %v930 = vadd.f32 %v683, %v929
      %931 = vdwg.mxu0
      %932 = vmatpush.bf16.msra.mxu0 0
      %933 = vmatpush.bf16.msra.mxu0 0
      %934 = vmatpush.bf16.msra.mxu0 0
      %935 = vmatpush.bf16.msra.mxu0 %v851
      %936 = vmatpush.bf16.msra.mxu0 %v798
      %937 = vmatpush.bf16.msra.mxu0 %v792
      %938 = vmatpush.bf16.msra.mxu0 %v786
      %939 = vmatpush.bf16.msra.mxu0 %v780
      %940 = vmatmul.bf16.gmra.mxu0 %v832
      %v941 = vpop.f32.mrf.mxu0
      %v942 = vadd.f32 %v668, %v941
      %v943 = vpop.f32.mrf.mxu0
      %v944 = vadd.f32 %v673, %v943
      %945 = vmatmul.bf16.gmra.mxu0 %v835
      %v946 = vpop.f32.mrf.mxu0
      %v947 = vadd.f32 %v678, %v946
      %v948 = vpop.f32.mrf.mxu0
      %v949 = vadd.f32 %v683, %v948
      %950 = vdwg.mxu0
      %951 = vmatpush.bf16.msra.mxu0 0
      %952 = vmatpush.bf16.msra.mxu0 0
      %953 = vmatpush.bf16.msra.mxu0 0
      %954 = vmatpush.bf16.msra.mxu0 %v854
      %955 = vmatpush.bf16.msra.mxu0 %v799
      %956 = vmatpush.bf16.msra.mxu0 %v793
      %957 = vmatpush.bf16.msra.mxu0 %v787
      %958 = vmatpush.bf16.msra.mxu0 %v781
      %959 = vmatmul.bf16.gmra.mxu0 %v832
      %v960 = vpop.f32.mrf.mxu0
      %v961 = vadd.f32 %v668, %v960
      %v962 = vpop.f32.mrf.mxu0
      %v963 = vadd.f32 %v673, %v962
      %964 = vmatmul.bf16.gmra.mxu0 %v835
      %v965 = vpop.f32.mrf.mxu0
      %v966 = vadd.f32 %v678, %v965
      %v967 = vpop.f32.mrf.mxu0
      %v968 = vadd.f32 %v683, %v967
      %969 = vdwg.mxu0
      %v970 = vmax.f32 %v866, 0.0
      %v971 = vmax.f32 %v885, 0.0
      %v972 = vmax.f32 %v904, 0.0
      %v973 = vmax.f32 %v923, 0.0
      %v974 = vmax.f32 %v942, 0.0
      %v975 = vmax.f32 %v961, 0.0
      %v976 = vmax.f32 %v868, 0.0
      %v977 = vmax.f32 %v887, 0.0
      %v978 = vmax.f32 %v906, 0.0
      %v979 = vmax.f32 %v925, 0.0
      %v980 = vmax.f32 %v944, 0.0
      %v981 = vmax.f32 %v963, 0.0
      %v982 = vmax.f32 %v871, 0.0
      %v983 = vmax.f32 %v890, 0.0
      %v984 = vmax.f32 %v909, 0.0
      %v985 = vmax.f32 %v928, 0.0
      %v986 = vmax.f32 %v947, 0.0
      %v987 = vmax.f32 %v966, 0.0
      %v988 = vmax.f32 %v873, 0.0
      %v989 = vmax.f32 %v892, 0.0
      %v990 = vmax.f32 %v911, 0.0
      %v991 = vmax.f32 %v930, 0.0
      %v992 = vmax.f32 %v949, 0.0
      %v993 = vmax.f32 %v968, 0.0
      %v994 = vpack.c.bf16 %v976, %v970
      %v995 = vpack.c.bf16 %v977, %v971
      %v996 = vpack.c.bf16 %v978, %v972
      %v997 = vpack.c.bf16 %v979, %v973
      %v998 = vpack.c.bf16 %v980, %v974
      %v999 = vpack.c.bf16 %v981, %v975
      %v1000 = vpack.c.bf16 %v988, %v982
      %v1001 = vpack.c.bf16 %v989, %v983
      %v1002 = vpack.c.bf16 %v990, %v984
      %v1003 = vpack.c.bf16 %v991, %v985
      %v1004 = vpack.c.bf16 %v992, %v986
      %v1005 = vpack.c.bf16 %v993, %v987
      %1007 = vset.pattern.permute.xlu0 0
      %1008 = vperm.xlu0 %1007, %v664
      %v1009 = vpop.permute.xlu0 %1008
      %vm1011 = vcmask 261120
      %v1013 = vsel %vm1011, %v663, 0
      %1015 = vmatpush.bf16.msra.mxu0 0
      %1016 = vmatpush.bf16.msra.mxu0 0
      %1017 = vmatpush.bf16.msra.mxu0 0
      %1018 = vmatpush.bf16.msra.mxu0 0
      %1019 = vmatpush.bf16.msra.mxu0 0
      %1020 = vmatpush.bf16.msra.mxu0 0
      %1021 = vmatpush.bf16.msra.mxu0 %v1000
      %1022 = vmatpush.bf16.msra.mxu0 %v994
      %1023 = vmatmul.bf16.gmra.mxu0 %v1013
      %v1024 = vpop.f32.mrf.mxu0
      %v1025 = vadd.f32 %v1009, %v1024
      %v1026 = vpop.f32.mrf.mxu0
      %1027 = vdwg.mxu0
      %1028 = vmatpush.bf16.msra.mxu0 0
      %1029 = vmatpush.bf16.msra.mxu0 0
      %1030 = vmatpush.bf16.msra.mxu0 0
      %1031 = vmatpush.bf16.msra.mxu0 0
      %1032 = vmatpush.bf16.msra.mxu0 0
      %1033 = vmatpush.bf16.msra.mxu0 0
      %1034 = vmatpush.bf16.msra.mxu0 %v1001
      %1035 = vmatpush.bf16.msra.mxu0 %v995
      %1036 = vmatmul.bf16.gmra.mxu0 %v1013
      %v1037 = vpop.f32.mrf.mxu0
      %v1038 = vadd.f32 %v1009, %v1037
      %v1039 = vpop.f32.mrf.mxu0
      %1040 = vdwg.mxu0
      %1041 = vmatpush.bf16.msra.mxu0 0
      %1042 = vmatpush.bf16.msra.mxu0 0
      %1043 = vmatpush.bf16.msra.mxu0 0
      %1044 = vmatpush.bf16.msra.mxu0 0
      %1045 = vmatpush.bf16.msra.mxu0 0
      %1046 = vmatpush.bf16.msra.mxu0 0
      %1047 = vmatpush.bf16.msra.mxu0 %v1002
      %1048 = vmatpush.bf16.msra.mxu0 %v996
      %1049 = vmatmul.bf16.gmra.mxu0 %v1013
      %v1050 = vpop.f32.mrf.mxu0
      %v1051 = vadd.f32 %v1009, %v1050
      %v1052 = vpop.f32.mrf.mxu0
      %1053 = vdwg.mxu0
      %1054 = vmatpush.bf16.msra.mxu0 0
      %1055 = vmatpush.bf16.msra.mxu0 0
      %1056 = vmatpush.bf16.msra.mxu0 0
      %1057 = vmatpush.bf16.msra.mxu0 0
      %1058 = vmatpush.bf16.msra.mxu0 0
      %1059 = vmatpush.bf16.msra.mxu0 0
      %1060 = vmatpush.bf16.msra.mxu0 %v1003
      %1061 = vmatpush.bf16.msra.mxu0 %v997
      %1062 = vmatmul.bf16.gmra.mxu0 %v1013
      %v1063 = vpop.f32.mrf.mxu0
      %v1064 = vadd.f32 %v1009, %v1063
      %v1065 = vpop.f32.mrf.mxu0
      %1066 = vdwg.mxu0
      %1067 = vmatpush.bf16.msra.mxu0 0
      %1068 = vmatpush.bf16.msra.mxu0 0
      %1069 = vmatpush.bf16.msra.mxu0 0
      %1070 = vmatpush.bf16.msra.mxu0 0
      %1071 = vmatpush.bf16.msra.mxu0 0
      %1072 = vmatpush.bf16.msra.mxu0 0
      %1073 = vmatpush.bf16.msra.mxu0 %v1004
      %1074 = vmatpush.bf16.msra.mxu0 %v998
      %1075 = vmatmul.bf16.gmra.mxu0 %v1013
      %v1076 = vpop.f32.mrf.mxu0
      %v1077 = vadd.f32 %v1009, %v1076
      %v1078 = vpop.f32.mrf.mxu0
      %1079 = vdwg.mxu0
      %1080 = vmatpush.bf16.msra.mxu0 0
      %1081 = vmatpush.bf16.msra.mxu0 0
      %1082 = vmatpush.bf16.msra.mxu0 0
      %1083 = vmatpush.bf16.msra.mxu0 0
      %1084 = vmatpush.bf16.msra.mxu0 0
      %1085 = vmatpush.bf16.msra.mxu0 0
      %1086 = vmatpush.bf16.msra.mxu0 %v1005
      %1087 = vmatpush.bf16.msra.mxu0 %v999
      %1088 = vmatmul.bf16.gmra.mxu0 %v1013
      %v1089 = vpop.f32.mrf.mxu0
      %v1090 = vadd.f32 %v1009, %v1089
      %v1091 = vpop.f32.mrf.mxu0
      %1092 = vdwg.mxu0
      %1093 = vst [vmem:[%s393] sm:$0xff] %v970
      %1094 = vst [vmem:[%s393 + $0x8] sm:$0xff] %v971
      %1095 = vst [vmem:[%s393 + $0x10] sm:$0xff] %v972
      %1096 = vst [vmem:[%s393 + $0x18] sm:$0xff] %v976
      %1097 = vst [vmem:[%s393 + $0x20] sm:$0xff] %v977
      %1098 = vst [vmem:[%s393 + $0x28] sm:$0xff] %v978
      %1099 = vst [vmem:[%s393 + $0x30] sm:$0xff] %v982
      %1100 = vst [vmem:[%s393 + $0x38] sm:$0xff] %v983
      %1101 = vst [vmem:[%s393 + $0x40] sm:$0xff] %v984
      %1102 = vst [vmem:[%s393 + $0x48] sm:$0xff] %v988
      %1103 = vst [vmem:[%s393 + $0x50] sm:$0xff] %v989
      %1104 = vst [vmem:[%s393 + $0x58] sm:$0xff] %v990
      %v1105 = vld [vmem:[%s3] sm:$0x77]
      %v1106 = vld [vmem:[%s3 + $0x8] sm:$0x7]
      %v1107 = vsub.f32 %v1025, %v1064
      %v1108 = vsub.f32 %v1038, %v1077
      %v1109 = vsub.f32 %v1051, %v1090
      %v1110 = vmul.f32 %v1107, %v1107
      %v1111 = vmul.f32 %v1108, %v1108
      %v1112 = vmul.f32 %v1109, %v1109
      %1115 = vst [vmem:[#allocation1] ss:$2 sm:$0xff] %v1105
      %s1116 = scalar_lea.vmem [#allocation1], 16
      %1117 = vst [vmem:[%s1116] ss:$2 sm:$0xff] %v1106
      %v1118 = vld.sshfl [vmem:[#allocation1] sm:$0xff pattern:$0x75316420]
      %v1119 = vld.sshfl [vmem:[#allocation1 + $0x8] sm:$0xff pattern:$0x75316420]
      %v1120 = vld.sshfl [vmem:[#allocation1 + $0x10] sm:$0xff pattern:$0x75316420]
      %v1124 = vmul.f32 %v1110, %v1118
      %v1125 = vmul.f32 %v1111, %v1119
      %v1126 = vmul.f32 %v1112, %v1120
      %vm1127 = vcmask 1042432
      %v1128 = vsel %vm1127, %v1124, 0.0
      %v1129 = vsel %vm1127, %v1125, 0.0
      %v1130 = vadd.f32 %v1128, %v1129
      %v1131 = vsel %vm1127, %v1126, 0.0
      %v1132 = vadd.f32 %v1130, %v1131
      %1133 = vadd.xlane.f32.xlu0 %v1132
      %v1134 = vpop.xlane.xlu0 %1133
      %v1135 = vrot.slane %v1134, 4
      %v1136 = vadd.f32 %v1134, %v1135
      %v1137 = vrot.slane %v1136, 2
      %v1138 = vadd.f32 %v1136, %v1137
      %v1139 = vrot.slane %v1138, 1
      %v1140 = vadd.f32 %v1138, %v1139
      %s1141 = vtos %v1140
      %v1142 = vld [vmem:[%s386] sm:$0x77]
      %v1143 = vld [vmem:[%s386 + $0x8] sm:$0x7]
      %1146 = vst [vmem:[#allocation1] ss:$2 sm:$0xff] %v1142
      %s1147 = scalar_lea.vmem [#allocation1], 16
      %1148 = vst [vmem:[%s1147] ss:$2 sm:$0xff] %v1143
      %v1149 = vld.sshfl [vmem:[#allocation1] sm:$0xff pattern:$0x75316420]
      %v1150 = vld.sshfl [vmem:[#allocation1 + $0x8] sm:$0xff pattern:$0x75316420]
      %v1151 = vld.sshfl [vmem:[#allocation1 + $0x10] sm:$0xff pattern:$0x75316420]
      %v1155 = vsub.f32 %v1025, %v1149
      %v1156 = vsub.f32 %v1038, %v1150
      %v1157 = vsub.f32 %v1051, %v1151
      %v1158 = vmul.f32 %v1155, %v1155
      %v1159 = vmul.f32 %v1156, %v1156
      %v1160 = vmul.f32 %v1157, %v1157
      %1161 = vst [vmem:[#allocation1] ss:$2 sm:$0xff] %v1105
      %s1162 = scalar_lea.vmem [#allocation1], 16
      %1163 = vst [vmem:[%s1162] ss:$2 sm:$0xff] %v1106
      %v1164 = vld.sshfl [vmem:[#allocation1] sm:$0xff pattern:$0x75316420]
      %v1165 = vld.sshfl [vmem:[#allocation1 + $0x8] sm:$0xff pattern:$0x75316420]
      %v1166 = vld.sshfl [vmem:[#allocation1 + $0x10] sm:$0xff pattern:$0x75316420]
      %v1170 = vmul.f32 %v1158, %v1164
      %v1171 = vmul.f32 %v1159, %v1165
      %v1172 = vmul.f32 %v1160, %v1166
      %v1173 = vsel %vm1127, %v1170, 0.0
      %v1174 = vsel %vm1127, %v1171, 0.0
      %v1175 = vadd.f32 %v1173, %v1174
      %v1176 = vsel %vm1127, %v1172, 0.0
      %v1177 = vadd.f32 %v1175, %v1176
      %1178 = vadd.xlane.f32.xlu0 %v1177
      %v1179 = vpop.xlane.xlu0 %1178
      %v1180 = vrot.slane %v1179, 4
      %v1181 = vadd.f32 %v1179, %v1180
      %v1182 = vrot.slane %v1181, 2
      %v1183 = vadd.f32 %v1181, %v1182
      %v1184 = vrot.slane %v1183, 1
      %v1185 = vadd.f32 %v1183, %v1184
      %s1186 = vtos %v1185
      %p1187 = scmp.lt.s32.totalorder %s21, 1
      %s1188 = scalar_select %p1187, 1, 0
      %s1189 = scvt.s32.f32 %s1188
      %s1190 = smul.f32 %s1186, %s1189
      %v1191 = vlaneseq
      %v1192 = vshrl.u32 %v1191, 7
      %vm1193 = vcmp.eq.s32.totalorder %v1192, 0
      %v1194 = vstv %s1190
      %v1195 = vstv %s1141
      %v1196 = vsel %vm1193, %v1194, %v1195
      %1197 = vst [vmem:[%s397] sm:$0x3] %v1196
      %p1198 = scmp.lt.s32.totalorder %s21, 1
      %s1199 = scalar_select %p1198, %s21, 1
      %s1200 = smul.addr %s1199, 12
      %s1201 = smul.addr %s1200, 8
      %s1202 = scalar_lea.vmem %s8, %s1201
      %p1203 = scmp.lt.s32.totalorder %s21, 1
      %s1204 = scalar_select %p1203, %s21, 1
      %s1205 = smul.addr %s1204, 2
      %s1206 = scalar_lea.vmem %s9, %s1205
      // Predicated region
      $region53: #{_consistency_apply_pair.1} parent=51 // pred_check
        %p1207 = pneg %p226
      $region54: #{_consistency_apply_pair.1} parent=51 // pred_check_branch
        %1209 = sbr.rel (%p1207) target = $region56
      $region55: #{_consistency_apply_pair.1} parent=51 // pred_region
        _
      $region56: #{_consistency_apply_pair.1} parent=51 // pred_fallthru
        _
      // Predicated region
      $region57: #{_consistency_apply_pair.1} parent=51 // pred_check
        %p1210 = pneg %p252
      $region58: #{_consistency_apply_pair.1} parent=51 // pred_check_branch
        %1212 = sbr.rel (%p1210) target = $region60
      $region59: #{_consistency_apply_pair.1} parent=51 // pred_region
        _
      $region60: #{_consistency_apply_pair.1} parent=51 // pred_fallthru
        _
    $region52: #{_consistency_apply_pair.1} parent=5 // pred_fallthru
      _
    %p1213 = scmp.le.s32.totalorder 2, %s16
    // Predicated region
    $region61: #{_consistency_apply_pair.1} parent=5 // pred_check
      %p1214 = pneg %p1213
    $region62: #{_consistency_apply_pair.1} parent=5 // pred_check_branch
      %1216 = sbr.rel (%p1214) target = $region64
    $region63: #{_consistency_apply_pair.1} parent=5 // pred_region
      %s1217 = ssub.s32 %s16, 2
      // Predicated region
      $region65: #{_consistency_apply_pair.1} parent=63 // pred_check
        %p1218 = pneg %p232
      $region66: #{_consistency_apply_pair.1} parent=63 // pred_check_branch
        %1220 = sbr.rel (%p1218) target = $region68
      $region67: #{_consistency_apply_pair.1} parent=63 // pred_region
        %p1221 = scmp.lt.s32.totalorder %s22, 1
        %s1222 = scalar_select %p1221, %s22, 1
        %s1223 = smul.addr %s1222, 12
        %s1224 = smul.addr %s1223, 8
        %s1225 = scalar_lea.vmem %s8, %s1224
      $region68: #{_consistency_apply_pair.1} parent=63 // pred_fallthru
        _
      // Predicated region
      $region69: #{_consistency_apply_pair.1} parent=63 // pred_check
        %p1226 = pneg %p258
      $region70: #{_consistency_apply_pair.1} parent=63 // pred_check_branch
        %1228 = sbr.rel (%p1226) target = $region72
      $region71: #{_consistency_apply_pair.1} parent=63 // pred_region
        %p1229 = scmp.lt.s32.totalorder %s22, 1
        %s1230 = scalar_select %p1229, %s22, 1
        %s1231 = smul.addr %s1230, 2
        %s1232 = scalar_lea.vmem %s9, %s1231
      $region72: #{_consistency_apply_pair.1} parent=63 // pred_fallthru
        _
    $region64: #{_consistency_apply_pair.1} parent=5 // pred_fallthru
      _
  $region6: #{_consistency_apply_pair.1} parent=0 // loop_footer
    %s20 = sadd.s32 1, %s16
  $region7: #{_consistency_apply_pair.1} parent=0 // loop_footer_branch
    %15 = sbr.rel target = $region3
  $region8: #{_consistency_apply_pair.1} parent=0 // loop_exit
    _

</llo_original>
